<compile_context>
chip_gen: v7x
topology: tpu7x:2x2x1
jax: 0.10.0
libtpu: 0.0.40
codegen_flags: <defaults>
</compile_context>

<pallas_src>
import jax
import jax.numpy as jnp
from jax.experimental import pallas as pl
from jax.experimental.pallas import tpu as pltpu

ONE_HOT_0_ENCODING_SIZE = 8   # F0
ONE_HOT_1_ENCODING_SIZE = 6   # F1 (only feeds the dead lin_1_input path)
HIDDEN = 32
N_LAYERS = 2                  # statically unrolled inside the kernel
MISC_ROWS = 5                 # b_eff, b_l1, w_out0^T, w_out1^T, [b_out0,b_out1]


def unisage_kernel(x0_ref, inc_ref, invdeg_ref, slab_ref, out_ref):
    f32 = jnp.float32
    GB, N0, F0 = x0_ref.shape            # graphs-per-step, nodes, input feats
    H = slab_ref.shape[-1]
    base = F0 + H

    x0 = x0_ref[...]                     # (GB, N0, F0)
    inc = inc_ref[...]                   # (GB, N0, N1)  dense 0/1, f32
    inv_deg = invdeg_ref[...]            # (GB, N0, 1)   1/degree (host-computed)

    # ---- single resident parameter slab, sliced statically (free) ----------
    w_eff = slab_ref[0:F0, :]            # (F0, H) lin_0_input folded into layer-0
    w_l1 = slab_ref[F0:base, :]          # (H, H)  layer-1 linear
    b_eff = slab_ref[base + 0:base + 1, :]       # (1, H)
    b_l1 = slab_ref[base + 1:base + 2, :]        # (1, H)
    w_o0 = slab_ref[base + 2:base + 3, :]        # (1, H)  lin_0 weight row
    w_o1 = slab_ref[base + 3:base + 4, :]        # (1, H)  lin_1 weight row
    bo = slab_ref[base + 4:base + 5, :]          # (1, H)  [b_out0, b_out1, 0...]
    b_out0 = bo[:, 0:1]                          # (1, 1)
    b_out1 = bo[:, 1:2]                          # (1, 1)

    def v2e(h):
        # vertex -> edge (e_aggr='sum'): incidence_1^T @ h, batched over graphs.
        return jnp.einsum('bne,bnh->beh', inc, h, preferred_element_type=f32)

    def e2v(x1):
        # edge -> vertex (pre-normalization): incidence_1 @ x1, batched.
        return jnp.einsum('bne,beh->bnh', inc, x1, preferred_element_type=f32)

    # ---- layer 0 (lin_0_input folded into the layer-0 linear on the host) --
    # Node-wise linear stacked across the group: one (GB*N0, F0)@(F0, H) MXU op.
    h = (jnp.dot(x0.reshape(GB * N0, F0), w_eff, preferred_element_type=f32)
         + b_eff).reshape(GB, N0, H)
    x1 = v2e(h)
    h = h + e2v(x1) * inv_deg            # v_aggr='mean'

    # ---- layer 1 ------------------------------------------------------------
    h = (jnp.dot(h.reshape(GB * N0, H), w_l1, preferred_element_type=f32)
         + b_l1).reshape(GB, N0, H)
    x1 = v2e(h)
    h = h + e2v(x1) * inv_deg

    # ---- output heads (H -> 1) as VPU multiply + lane reduction -------------
    y0 = jnp.sum(h * w_o0, axis=-1) + b_out0     # (GB, N0)
    y1 = jnp.sum(x1 * w_o1, axis=-1) + b_out1    # (GB, N1)

    def nanmean_rows(y):                          # (GB, M) -> (GB,)
        isn = jnp.isnan(y)
        cnt = jnp.sum(jnp.where(isn, 0.0, 1.0), axis=-1)
        s = jnp.sum(jnp.where(isn, 0.0, y), axis=-1)
        m = s / cnt
        return jnp.where(jnp.isnan(m), 0.0, m)

    res = nanmean_rows(y0) + nanmean_rows(y1)     # (GB,)
    out_ref[...] = res.reshape(1, GB)             # lane-dense single store


def unisage_forward_batched(x0_b, inc_b, params, num_groups=None):
    """Batched forward: x0_b (B,N0,F0), inc_b (B,N0,N1) -> (B,) outputs."""
    B, N0, F0 = x0_b.shape
    N1 = inc_b.shape[-1]
    H = params["w_l1"].shape[0]

    # Default: 2 grid steps (v7x 2-TC sharding; ~free on v5e/v6e), else 1.
    if num_groups is None:
        num_groups = 2 if (B >= 2 and B % 2 == 0) else 1
    assert B % num_groups == 0
    GB = B // num_groups

    # ---- host-side prep (tiny, once per call) -------------------------------
    # Fold lin_0_input into the layer-0 linear (valid: no nonlinearity/norm
    # between them in eval mode).
    w_eff = params["w_in0"] @ params["w_l0"]                      # (F0, H)
    b_eff = params["b_in0"] @ params["w_l0"] + params["b_l0"]     # (1, H)

    # One padded parameter slab: [w_eff; w_l1; b_eff; b_l1; w_out0^T; w_out1^T;
    # (b_out0, b_out1)] -> (48, H), a single resident VMEM input.
    rows = F0 + H + MISC_ROWS
    rows_pad = ((rows + 7) // 8) * 8
    slab = jnp.zeros((rows_pad, H), jnp.float32)
    slab = slab.at[0:F0, :].set(w_eff)
    slab = slab.at[F0:F0 + H, :].set(params["w_l1"])
    slab = slab.at[F0 + H + 0, :].set(b_eff[0])
    slab = slab.at[F0 + H + 1, :].set(params["b_l1"][0])
    slab = slab.at[F0 + H + 2, :].set(params["w_out0"][:, 0])
    slab = slab.at[F0 + H + 3, :].set(params["w_out1"][:, 0])
    slab = slab.at[F0 + H + 4, 0].set(params["b_out0"][0, 0])
    slab = slab.at[F0 + H + 4, 1].set(params["b_out1"][0, 0])

    # Mean-aggregation normalization: 1/degree (degree 0 -> inf -> NaN later,
    # absorbed by nanmean exactly like the torch reference).
    inc_f32 = inc_b.astype(jnp.float32)
    inv_deg = 1.0 / jnp.sum(inc_f32, axis=-1, keepdims=True)      # (B, N0, 1)

    in_specs = [
        pl.BlockSpec((GB, N0, F0), lambda g: (g, 0, 0)),          # x0 group
        pl.BlockSpec((GB, N0, N1), lambda g: (g, 0, 0)),          # incidence group
        pl.BlockSpec((GB, N0, 1), lambda g: (g, 0, 0)),           # inv_deg group
        pl.BlockSpec((rows_pad, H), lambda g: (0, 0)),            # resident slab
    ]
    out_spec = pl.BlockSpec((None, 1, GB), lambda g: (g, 0, 0))

    out = pl.pallas_call(
        unisage_kernel,
        out_shape=jax.ShapeDtypeStruct((num_groups, 1, GB), jnp.float32),
        grid=(num_groups,),
        in_specs=in_specs,
        out_specs=out_spec,
        compiler_params=pltpu.CompilerParams(
            dimension_semantics=("parallel",),   # v7x 2-TC sharding of groups
        ),
    )(x0_b.astype(jnp.float32), inc_f32, inv_deg, slab)
    return out.reshape(B)


def unisage_forward(x0, incidence_1, params):
    """Single-graph forward matching the module's signature; returns shape (1,)."""
    return unisage_forward_batched(x0[None], incidence_1[None], params,
                                   num_groups=1).reshape(1)


def reference_forward(x0, inc, p):
    """Pure-JAX reference mirroring the (unfused) PyTorch forward (eval mode)."""
    h0 = x0 @ p["w_in0"] + p["b_in0"]
    inv_deg = 1.0 / jnp.sum(inc, axis=1, keepdims=True)
    x1 = None
    for w, b in ((p["w_l0"], p["b_l0"]), (p["w_l1"], p["b_l1"])):
        h0 = h0 @ w + b
        x1 = inc.T @ h0
        h0 = h0 + (inc @ x1) * inv_deg
    y0 = h0 @ p["w_out0"] + p["b_out0"]
    y1 = x1 @ p["w_out1"] + p["b_out1"]

    def nm(y):
        m = jnp.nanmean(y, axis=0)
        return jnp.where(jnp.isnan(m), 0.0, m)

    return nm(y0) + nm(y1)


if __name__ == "__main__":
    key = jax.random.PRNGKey(0)
    B = 8                                  # graphs per pallas_call
    N0, N1 = 16, 12                        # nodes, hyperedges per graph
    F0, F1, H = ONE_HOT_0_ENCODING_SIZE, ONE_HOT_1_ENCODING_SIZE, HIDDEN

    ks = jax.random.split(key, 12)

    def linear_init(kw, kb, fan_in, fan_out):
        lim = 1.0 / (fan_in ** 0.5)
        w = jax.random.uniform(kw, (fan_in, fan_out), jnp.float32, -lim, lim)
        b = jax.random.uniform(kb, (1, fan_out), jnp.float32, -lim, lim)
        return w, b

    w_in0, b_in0 = linear_init(ks[0], ks[1], F0, H)     # lin_0_input
    # lin_1_input (F1 -> H) exists in the module but is dead w.r.t. the output.
    w_l0, b_l0 = linear_init(ks[2], ks[3], H, H)        # UniSAGELayer 0 linear
    w_l1, b_l1 = linear_init(ks[4], ks[5], H, H)        # UniSAGELayer 1 linear
    w_out0, b_out0 = linear_init(ks[6], ks[7], H, 1)    # lin_0
    w_out1, b_out1 = linear_init(ks[8], ks[9], H, 1)    # lin_1

    params = dict(w_in0=w_in0, b_in0=b_in0,
                  w_l0=w_l0, b_l0=b_l0, w_l1=w_l1, b_l1=b_l1,
                  w_out0=w_out0, b_out0=b_out0, w_out1=w_out1, b_out1=b_out1)

    # Batch of graphs: one-hot node features; dense 0/1 incidence with deg >= 1
    # for every node (matches the reference's NaN-free regime).
    # TODO(synk): add a degree-0-node test (NaN / nanmean path) before relying
    # on that edge case in production.
    x0_b = jax.nn.one_hot((jnp.arange(B * N0) % F0).reshape(B, N0), F0,
                          dtype=jnp.float32)
    inc_b = jax.random.bernoulli(ks[10], 0.4, (B, N0, N1)).astype(jnp.float32)
    rows = jnp.arange(N0)
    inc_b = inc_b.at[:, rows, rows % N1].set(1.0)

    out = jax.block_until_ready(unisage_forward_batched(x0_b, inc_b, params))
    ref = jnp.stack([reference_forward(x0_b[b], inc_b[b], params)[0]
                     for b in range(B)])

    assert out.shape == (B,)
    assert jnp.allclose(out, ref, rtol=1e-4, atol=1e-4), (out, ref)

    # Fully collapsed grid (single step, best for v5e/v6e single-TC chips).
    out_g1 = jax.block_until_ready(
        unisage_forward_batched(x0_b, inc_b, params, num_groups=1))
    assert jnp.allclose(out_g1, ref, rtol=1e-4, atol=1e-4), (out_g1, ref)

    # Single-graph path (matches the module's forward: output shape (1,)).
    out1 = jax.block_until_ready(unisage_forward(x0_b[0], inc_b[0], params))
    assert out1.shape == (1,)
    assert jnp.allclose(out1, ref[0], rtol=1e-4, atol=1e-4), (out1, ref[0])

    print("KERNEL_OK")
</pallas_src>

<mosaic_0001>
module attributes {stable_mosaic.version = 11 : i64} {
  func.func @unisage_kernel(%arg0: i32, %arg1: memref<4x16x8xf32, #tpu.memory_space<vmem>>, %arg2: memref<4x16x12xf32, #tpu.memory_space<vmem>>, %arg3: memref<4x16x1xf32, #tpu.memory_space<vmem>>, %arg4: memref<48x32xf32, #tpu.memory_space<vmem>>, %arg5: memref<1x1x4xf32, #tpu.memory_space<vmem>>) attributes {dimension_semantics = [#tpu.dimension_semantics<parallel>], iteration_bounds = array<i64: 2>, scalar_prefetch = 0 : i64, scratch_operands = 0 : i64, tpu.core_type = #tpu.core_type<tc>, window_params = [{transform_indices = @transform_0, window_bounds = array<i64: 4, 16, 8>}, {transform_indices = @transform_1, window_bounds = array<i64: 4, 16, 12>}, {transform_indices = @transform_2, window_bounds = array<i64: 4, 16, 1>}, {pipeline_mode = #tpu.pipeline_mode<synchronous>, transform_indices = @transform_3, window_bounds = array<i64: 48, 32>}, {transform_indices = @transform_4, window_bounds = array<i64: 1, 1, 4>}]} {
    %c0 = arith.constant 0 : index
    %c0_0 = arith.constant 0 : index
    %c0_1 = arith.constant 0 : index
    %0 = vector.load %arg1[%c0, %c0_0, %c0_1] : memref<4x16x8xf32, #tpu.memory_space<vmem>>, vector<4x16x8xf32>
    %c0_2 = arith.constant 0 : index
    %c0_3 = arith.constant 0 : index
    %c0_4 = arith.constant 0 : index
    %1 = vector.load %arg2[%c0_2, %c0_3, %c0_4] : memref<4x16x12xf32, #tpu.memory_space<vmem>>, vector<4x16x12xf32>
    %c0_5 = arith.constant 0 : index
    %c0_6 = arith.constant 0 : index
    %c0_7 = arith.constant 0 : index
    %2 = vector.load %arg3[%c0_5, %c0_6, %c0_7] : memref<4x16x1xf32, #tpu.memory_space<vmem>>, vector<4x16x1xf32>
    %c0_8 = arith.constant 0 : index
    %c0_9 = arith.constant 0 : index
    %3 = vector.load %arg4[%c0_8, %c0_9] : memref<48x32xf32, #tpu.memory_space<vmem>>, vector<8x32xf32>
    %c8 = arith.constant 8 : index
    %c0_10 = arith.constant 0 : index
    %4 = vector.load %arg4[%c8, %c0_10] : memref<48x32xf32, #tpu.memory_space<vmem>>, vector<32x32xf32>
    %c40 = arith.constant 40 : index
    %c0_11 = arith.constant 0 : index
    %5 = vector.load %arg4[%c40, %c0_11] : memref<48x32xf32, #tpu.memory_space<vmem>>, vector<1x32xf32>
    %c41 = arith.constant 41 : index
    %c0_12 = arith.constant 0 : index
    %6 = vector.load %arg4[%c41, %c0_12] : memref<48x32xf32, #tpu.memory_space<vmem>>, vector<1x32xf32>
    %c42 = arith.constant 42 : index
    %c0_13 = arith.constant 0 : index
    %7 = vector.load %arg4[%c42, %c0_13] : memref<48x32xf32, #tpu.memory_space<vmem>>, vector<1x32xf32>
    %c43 = arith.constant 43 : index
    %c0_14 = arith.constant 0 : index
    %8 = vector.load %arg4[%c43, %c0_14] : memref<48x32xf32, #tpu.memory_space<vmem>>, vector<1x32xf32>
    %c44 = arith.constant 44 : index
    %c0_15 = arith.constant 0 : index
    %9 = vector.load %arg4[%c44, %c0_15] : memref<48x32xf32, #tpu.memory_space<vmem>>, vector<1x32xf32>
    %10 = vector.extract_strided_slice %9 {offsets = [0, 0], sizes = [1, 1], strides = [1, 1]} : vector<1x32xf32> to vector<1x1xf32>
    %11 = vector.extract_strided_slice %9 {offsets = [0, 1], sizes = [1, 1], strides = [1, 1]} : vector<1x32xf32> to vector<1x1xf32>
    %12 = vector.shape_cast %0 : vector<4x16x8xf32> to vector<64x8xf32>
    %cst = arith.constant dense<0.000000e+00> : vector<64x32xf32>
    %13 = tpu.matmul %12, %3, %cst {dimension_numbers = #tpu.dot_dimension_numbers<[1], [0], [0], [1], [0, 0, 1, 1], [], []>} : vector<64x8xf32>, vector<8x32xf32>, vector<64x32xf32> -> vector<64x32xf32>
    %14 = vector.broadcast %5 : vector<1x32xf32> to vector<64x32xf32>
    %15 = arith.addf %13, %14 : vector<64x32xf32>
    %16 = vector.shape_cast %15 : vector<64x32xf32> to vector<4x16x32xf32>
    "tpu.trace_start"() <{level = 10 : i32, message = "bne,bnh->beh"}> : () -> ()
    %cst_16 = arith.constant dense<0.000000e+00> : vector<4x12x32xf32>
    %17 = tpu.matmul %1, %16, %cst_16 {dimension_numbers = #tpu.dot_dimension_numbers<[1], [1], [2], [2], [0, 0, 0, 2, 1, 2], [0], [0]>} : vector<4x16x12xf32>, vector<4x16x32xf32>, vector<4x12x32xf32> -> vector<4x12x32xf32>
    "tpu.trace_stop"() : () -> ()
    "tpu.trace_start"() <{level = 10 : i32, message = "bne,beh->bnh"}> : () -> ()
    %cst_17 = arith.constant dense<0.000000e+00> : vector<4x16x32xf32>
    %18 = tpu.matmul %1, %17, %cst_17 {dimension_numbers = #tpu.dot_dimension_numbers<[2], [1], [1], [2], [0, 0, 0, 1, 1, 2], [0], [0]>} : vector<4x16x12xf32>, vector<4x12x32xf32>, vector<4x16x32xf32> -> vector<4x16x32xf32>
    "tpu.trace_stop"() : () -> ()
    %19 = vector.broadcast %2 : vector<4x16x1xf32> to vector<4x16x32xf32>
    %20 = arith.mulf %18, %19 : vector<4x16x32xf32>
    %21 = arith.addf %16, %20 : vector<4x16x32xf32>
    %22 = vector.shape_cast %21 : vector<4x16x32xf32> to vector<64x32xf32>
    %cst_18 = arith.constant dense<0.000000e+00> : vector<64x32xf32>
    %23 = tpu.matmul %22, %4, %cst_18 {dimension_numbers = #tpu.dot_dimension_numbers<[1], [0], [0], [1], [0, 0, 1, 1], [], []>} : vector<64x32xf32>, vector<32x32xf32>, vector<64x32xf32> -> vector<64x32xf32>
    %24 = vector.broadcast %6 : vector<1x32xf32> to vector<64x32xf32>
    %25 = arith.addf %23, %24 : vector<64x32xf32>
    %26 = vector.shape_cast %25 : vector<64x32xf32> to vector<4x16x32xf32>
    "tpu.trace_start"() <{level = 10 : i32, message = "bne,bnh->beh"}> : () -> ()
    %cst_19 = arith.constant dense<0.000000e+00> : vector<4x12x32xf32>
    %27 = tpu.matmul %1, %26, %cst_19 {dimension_numbers = #tpu.dot_dimension_numbers<[1], [1], [2], [2], [0, 0, 0, 2, 1, 2], [0], [0]>} : vector<4x16x12xf32>, vector<4x16x32xf32>, vector<4x12x32xf32> -> vector<4x12x32xf32>
    "tpu.trace_stop"() : () -> ()
    "tpu.trace_start"() <{level = 10 : i32, message = "bne,beh->bnh"}> : () -> ()
    %cst_20 = arith.constant dense<0.000000e+00> : vector<4x16x32xf32>
    %28 = tpu.matmul %1, %27, %cst_20 {dimension_numbers = #tpu.dot_dimension_numbers<[2], [1], [1], [2], [0, 0, 0, 1, 1, 2], [0], [0]>} : vector<4x16x12xf32>, vector<4x12x32xf32>, vector<4x16x32xf32> -> vector<4x16x32xf32>
    "tpu.trace_stop"() : () -> ()
    %29 = vector.broadcast %2 : vector<4x16x1xf32> to vector<4x16x32xf32>
    %30 = arith.mulf %28, %29 : vector<4x16x32xf32>
    %31 = arith.addf %26, %30 : vector<4x16x32xf32>
    %32 = vector.shape_cast %7 : vector<1x32xf32> to vector<1x1x32xf32>
    %33 = vector.broadcast %32 : vector<1x1x32xf32> to vector<4x16x32xf32>
    %34 = arith.mulf %31, %33 : vector<4x16x32xf32>
    %cst_21 = arith.constant dense<0.000000e+00> : vector<4x16xf32>
    %35 = vector.multi_reduction <add>, %34, %cst_21 [2] : vector<4x16x32xf32> to vector<4x16xf32>
    %36 = vector.broadcast %10 : vector<1x1xf32> to vector<4x16xf32>
    %37 = arith.addf %35, %36 : vector<4x16xf32>
    %38 = vector.shape_cast %8 : vector<1x32xf32> to vector<1x1x32xf32>
    %39 = vector.broadcast %38 : vector<1x1x32xf32> to vector<4x12x32xf32>
    %40 = arith.mulf %27, %39 : vector<4x12x32xf32>
    %cst_22 = arith.constant dense<0.000000e+00> : vector<4x12xf32>
    %41 = vector.multi_reduction <add>, %40, %cst_22 [2] : vector<4x12x32xf32> to vector<4x12xf32>
    %42 = vector.broadcast %11 : vector<1x1xf32> to vector<4x12xf32>
    %43 = arith.addf %41, %42 : vector<4x12xf32>
    %44 = arith.cmpf one, %37, %37 : vector<4x16xf32>
    %cst_23 = arith.constant 0.000000e+00 : f32
    %cst_24 = arith.constant 1.000000e+00 : f32
    %45 = vector.broadcast %cst_23 : f32 to vector<4x16xf32>
    %46 = vector.broadcast %cst_24 : f32 to vector<4x16xf32>
    %47 = arith.select %44, %45, %46 : vector<4x16xi1>, vector<4x16xf32>
    %cst_25 = arith.constant dense<0.000000e+00> : vector<4xf32>
    %48 = vector.multi_reduction <add>, %47, %cst_25 [1] : vector<4x16xf32> to vector<4xf32>
    %cst_26 = arith.constant 0.000000e+00 : f32
    %49 = vector.broadcast %cst_26 : f32 to vector<4x16xf32>
    %50 = arith.select %44, %49, %37 : vector<4x16xi1>, vector<4x16xf32>
    %cst_27 = arith.constant dense<0.000000e+00> : vector<4xf32>
    %51 = vector.multi_reduction <add>, %50, %cst_27 [1] : vector<4x16xf32> to vector<4xf32>
    %52 = arith.divf %51, %48 : vector<4xf32>
    %53 = arith.cmpf one, %52, %52 : vector<4xf32>
    %cst_28 = arith.constant 0.000000e+00 : f32
    %54 = vector.broadcast %cst_28 : f32 to vector<4xf32>
    %55 = arith.select %53, %54, %52 : vector<4xi1>, vector<4xf32>
    %56 = arith.cmpf one, %43, %43 : vector<4x12xf32>
    %cst_29 = arith.constant 0.000000e+00 : f32
    %cst_30 = arith.constant 1.000000e+00 : f32
    %57 = vector.broadcast %cst_29 : f32 to vector<4x12xf32>
    %58 = vector.broadcast %cst_30 : f32 to vector<4x12xf32>
    %59 = arith.select %56, %57, %58 : vector<4x12xi1>, vector<4x12xf32>
    %cst_31 = arith.constant dense<0.000000e+00> : vector<4xf32>
    %60 = vector.multi_reduction <add>, %59, %cst_31 [1] : vector<4x12xf32> to vector<4xf32>
    %cst_32 = arith.constant 0.000000e+00 : f32
    %61 = vector.broadcast %cst_32 : f32 to vector<4x12xf32>
    %62 = arith.select %56, %61, %43 : vector<4x12xi1>, vector<4x12xf32>
    %cst_33 = arith.constant dense<0.000000e+00> : vector<4xf32>
    %63 = vector.multi_reduction <add>, %62, %cst_33 [1] : vector<4x12xf32> to vector<4xf32>
    %64 = arith.divf %63, %60 : vector<4xf32>
    %65 = arith.cmpf one, %64, %64 : vector<4xf32>
    %cst_34 = arith.constant 0.000000e+00 : f32
    %66 = vector.broadcast %cst_34 : f32 to vector<4xf32>
    %67 = arith.select %65, %66, %64 : vector<4xi1>, vector<4xf32>
    %68 = arith.addf %55, %67 : vector<4xf32>
    %69 = vector.shape_cast %68 : vector<4xf32> to vector<1x4xf32>
    %c0_35 = arith.constant 0 : index
    %c0_36 = arith.constant 0 : index
    %c0_37 = arith.constant 0 : index
    %70 = vector.load %arg5[%c0_35, %c0_36, %c0_37] : memref<1x1x4xf32, #tpu.memory_space<vmem>>, vector<1x1x4xf32>
    %71 = vector.shape_cast %70 : vector<1x1x4xf32> to vector<1x4xf32>
    %72 = vector.shape_cast %69 : vector<1x4xf32> to vector<1x1x4xf32>
    tpu.vector_store %arg5[%c0_35, %c0_36, %c0_37], %72 {strides = array<i32>} : memref<1x1x4xf32, #tpu.memory_space<vmem>>, vector<1x1x4xf32>,
    return
  }
  func.func @transform_0(%arg0: i32) -> (i32, i32, i32) {
    %c0_i32 = arith.constant 0 : i32
    %c0_i32_0 = arith.constant 0 : i32
    %c0_i32_1 = arith.constant 0 : i32
    return %arg0, %c0_i32, %c0_i32_0 : i32, i32, i32
  }
  func.func @transform_1(%arg0: i32) -> (i32, i32, i32) {
    %c0_i32 = arith.constant 0 : i32
    %c0_i32_0 = arith.constant 0 : i32
    %c0_i32_1 = arith.constant 0 : i32
    return %arg0, %c0_i32, %c0_i32_0 : i32, i32, i32
  }
  func.func @transform_2(%arg0: i32) -> (i32, i32, i32) {
    %c0_i32 = arith.constant 0 : i32
    %c0_i32_0 = arith.constant 0 : i32
    %c0_i32_1 = arith.constant 0 : i32
    return %arg0, %c0_i32, %c0_i32_0 : i32, i32, i32
  }
  func.func @transform_3(%arg0: i32) -> (i32, i32) {
    %c0_i32 = arith.constant 0 : i32
    %c0_i32_0 = arith.constant 0 : i32
    %c0_i32_1 = arith.constant 0 : i32
    return %c0_i32, %c0_i32_0 : i32, i32
  }
  func.func @transform_4(%arg0: i32) -> (i32, i32, i32) {
    %c0_i32 = arith.constant 0 : i32
    %c0_i32_0 = arith.constant 0 : i32
    %c0_i32_1 = arith.constant 0 : i32
    return %arg0, %c0_i32, %c0_i32_0 : i32, i32, i32
  }
}

</mosaic_0001>

<llo_original>
// kernel: tpu_custom_call.1
$region0: #{tpu_custom_call.1}
  #allocation0 [shape = 'u32[]', space=smem, size = 0x4, offset = 0x4, fixed_abs, tag = 'smem constant byte address 0x4 - core index']
  #allocation1 [shape = 'u32[144,128]{1,0:T(1,128)}', space=vmem, size = 0x12000, scoped, tag = 'internal scratch']
  %s0 = inlined_call_operand.vmem [shape: f32[8,16,8], index: 0, kind: input, shape index: {}]
  %s1 = inlined_call_operand.vmem [shape: f32[8,16,12], index: 1, kind: input, shape index: {}]
  %s2 = inlined_call_operand.vmem [shape: f32[8,16,1], index: 2, kind: input, shape index: {}]
  %s3 = inlined_call_operand.vmem [shape: f32[48,32], index: 3, kind: input, shape index: {}]
  %s4 = inlined_call_operand.hbm [shape: f32[2,1,4], index: 4, kind: output, shape index: {}]
  %s5 = sld [smem:[#allocation0]]
  $region49: #{tpu_custom_call.1} parent=0
    _
  %s7 = ssub.s32 1, %s5
  %s8 = scalar_select 0, %s7, %s5
  $region1: #{tpu_custom_call.1} parent=0
    #allocation2 [shape = 'u8[1024]{0}', space=vmem, size = 0x400, scoped, tag = 'output window, operand 0']
    #allocation3 [shape = 's32[2]{0}', space=sflag, size = 0x8, scoped, tag = 'scoped memory for tpu_custom_call.1']
    %9 = vsyncpa [#allocation3], 0
    %s10 = scalar_lea.sflag [#allocation3], 1
    %11 = vsyncpa %s10, 0
    loop: start=0, step=1, limit=4
    $region2: #{tpu_custom_call.1} parent=1 // loop_pre_header
      _
    $region3: #{tpu_custom_call.1} parent=1 // loop_header
      %s13 = sphi 0, %s17
      %p14 = scmp.ge.s32.totalorder %s13, 4
      %s23 = sphi 0, %s25
      %s26 = sphi 0, %s23
      %s27 = sphi 0, %s26
      %s43 = sphi 0, %s27
      %s49 = sphi 0, %s51
      %s52 = sphi 0, %s49
      %s53 = sphi 0, %s52
      %s69 = sphi 0, %s53
      %s75 = sphi 0, %s77
      %s78 = sphi 0, %s75
      %s79 = sphi 0, %s78
      %s95 = sphi 0, %s79
      %s99 = sphi 0, %s99
      %s101 = sphi 0, %s99
      %s102 = sphi 0, %s101
      %s116 = sphi 0, %s102
      %s122 = sphi 0, %s124
      %s125 = sphi 0, %s122
      %s126 = sphi 0, %s125
      %s142 = sphi 0, %s126
    $region4: #{tpu_custom_call.1} parent=1 // loop_header_branch
      %16 = sbr.rel (%p14) target = $region8
    $region5: #{tpu_custom_call.1} parent=1 // loop_body
      %s18 = ssub.s32 %s13, 1
      %s19 = ssub.s32 %s13, 2
      %s20 = sadd.s32 %s13, 1
      %s21 = ssub.s32 %s13, %s20
      %p22 = scmp.eq.s32.totalorder %s21, 0
      %s24 = sadd.s32 %s23, 1
      %s25 = scalar_select %p22, %s23, %s24
      %p28 = pneg %p22
      %p29 = scmp.eq.s32.totalorder %s13, 1
      %p30 = por %p28, %p29
      %p31 = scmp.ne.s32.totalorder %s23, %s26
      %p32 = scmp.eq.s32.totalorder %s13, 0
      %p33 = por %p31, %p32
      %p34 = scmp.ne.s32.totalorder %s23, %s26
      %p35 = scmp.eq.s32.totalorder %s18, 1
      %p36 = por %p34, %p35
      %p37 = scmp.ne.s32.totalorder %s26, %s27
      %p38 = scmp.eq.s32.totalorder %s18, 0
      %p39 = por %p37, %p38
      %p40 = scmp.ne.s32.totalorder %s26, %s27
      %p41 = scmp.eq.s32.totalorder %s19, 1
      %p42 = por %p40, %p41
      %p44 = scmp.ne.s32.totalorder %s27, %s43
      %p45 = scmp.eq.s32.totalorder %s19, 0
      %p46 = por %p44, %p45
      %s47 = ssub.s32 %s13, %s20
      %p48 = scmp.eq.s32.totalorder %s47, 0
      %s50 = sadd.s32 %s49, 1
      %s51 = scalar_select %p48, %s49, %s50
      %p54 = pneg %p48
      %p55 = scmp.eq.s32.totalorder %s13, 1
      %p56 = por %p54, %p55
      %p57 = scmp.ne.s32.totalorder %s49, %s52
      %p58 = scmp.eq.s32.totalorder %s13, 0
      %p59 = por %p57, %p58
      %p60 = scmp.ne.s32.totalorder %s49, %s52
      %p61 = scmp.eq.s32.totalorder %s18, 1
      %p62 = por %p60, %p61
      %p63 = scmp.ne.s32.totalorder %s52, %s53
      %p64 = scmp.eq.s32.totalorder %s18, 0
      %p65 = por %p63, %p64
      %p66 = scmp.ne.s32.totalorder %s52, %s53
      %p67 = scmp.eq.s32.totalorder %s19, 1
      %p68 = por %p66, %p67
      %p70 = scmp.ne.s32.totalorder %s53, %s69
      %p71 = scmp.eq.s32.totalorder %s19, 0
      %p72 = por %p70, %p71
      %s73 = ssub.s32 %s13, %s20
      %p74 = scmp.eq.s32.totalorder %s73, 0
      %s76 = sadd.s32 %s75, 1
      %s77 = scalar_select %p74, %s75, %s76
      %p80 = pneg %p74
      %p81 = scmp.eq.s32.totalorder %s13, 1
      %p82 = por %p80, %p81
      %p83 = scmp.ne.s32.totalorder %s75, %s78
      %p84 = scmp.eq.s32.totalorder %s13, 0
      %p85 = por %p83, %p84
      %p86 = scmp.ne.s32.totalorder %s75, %s78
      %p87 = scmp.eq.s32.totalorder %s18, 1
      %p88 = por %p86, %p87
      %p89 = scmp.ne.s32.totalorder %s78, %s79
      %p90 = scmp.eq.s32.totalorder %s18, 0
      %p91 = por %p89, %p90
      %p92 = scmp.ne.s32.totalorder %s78, %s79
      %p93 = scmp.eq.s32.totalorder %s19, 1
      %p94 = por %p92, %p93
      %p96 = scmp.ne.s32.totalorder %s79, %s95
      %p97 = scmp.eq.s32.totalorder %s19, 0
      %p98 = por %p96, %p97
      %s100 = sadd.s32 %s99, 1
      %p103 = scmp.eq.s32.totalorder %s13, 1
      %p104 = scmp.ne.s32.totalorder %s99, %s101
      %p105 = scmp.eq.s32.totalorder %s13, 0
      %p106 = por %p104, %p105
      %p107 = scmp.ne.s32.totalorder %s99, %s101
      %p108 = scmp.eq.s32.totalorder %s18, 1
      %p109 = por %p107, %p108
      %p110 = scmp.ne.s32.totalorder %s101, %s102
      %p111 = scmp.eq.s32.totalorder %s18, 0
      %p112 = por %p110, %p111
      %p113 = scmp.ne.s32.totalorder %s101, %s102
      %p114 = scmp.eq.s32.totalorder %s19, 1
      %p115 = por %p113, %p114
      %p117 = scmp.ne.s32.totalorder %s102, %s116
      %p118 = scmp.eq.s32.totalorder %s19, 0
      %p119 = por %p117, %p118
      %s120 = ssub.s32 %s13, %s20
      %p121 = scmp.eq.s32.totalorder %s120, 0
      %s123 = sadd.s32 %s122, 1
      %s124 = scalar_select %p121, %s122, %s123
      %p127 = pneg %p121
      %p128 = scmp.eq.s32.totalorder %s13, 1
      %p129 = por %p127, %p128
      %p130 = scmp.ne.s32.totalorder %s122, %s125
      %p131 = scmp.eq.s32.totalorder %s13, 0
      %p132 = por %p130, %p131
      %p133 = scmp.ne.s32.totalorder %s122, %s125
      %p134 = scmp.eq.s32.totalorder %s18, 1
      %p135 = por %p133, %p134
      %p136 = scmp.ne.s32.totalorder %s125, %s126
      %p137 = scmp.eq.s32.totalorder %s18, 0
      %p138 = por %p136, %p137
      %p139 = scmp.ne.s32.totalorder %s125, %s126
      %p140 = scmp.eq.s32.totalorder %s19, 1
      %p141 = por %p139, %p140
      %p143 = scmp.ne.s32.totalorder %s126, %s142
      %p144 = scmp.eq.s32.totalorder %s19, 0
      %p145 = por %p143, %p144
      %p146 = scmp.le.s32.totalorder 1, %s13
      %p147 = scmp.lt.s32.totalorder %s13, 3
      %p148 = pnand %p146, %p147
      %p149 = pneg %p148
      // Predicated region
      $region9: #{tpu_custom_call.1} parent=5 // pred_check
        _
      $region10: #{tpu_custom_call.1} parent=5 // pred_check_branch
        %151 = sbr.rel (%p148) target = $region12
      $region11: #{tpu_custom_call.1} parent=5 // pred_region
        %s152 = ssub.s32 %s13, 1
        // Predicated region
        $region13: #{tpu_custom_call.1} parent=11 // pred_check
          %p153 = pneg %p112
        $region14: #{tpu_custom_call.1} parent=11 // pred_check_branch
          %155 = sbr.rel (%p153) target = $region16
        $region15: #{tpu_custom_call.1} parent=11 // pred_region
          _
        $region16: #{tpu_custom_call.1} parent=11 // pred_fallthru
          _
      $region12: #{tpu_custom_call.1} parent=5 // pred_fallthru
        _
      %p156 = scmp.lt.s32.totalorder %s13, 2
      // Predicated region
      $region17: #{tpu_custom_call.1} parent=5 // pred_check
        %p157 = pneg %p156
      $region18: #{tpu_custom_call.1} parent=5 // pred_check_branch
        %159 = sbr.rel (%p157) target = $region20
      $region19: #{tpu_custom_call.1} parent=5 // pred_region
        // Predicated region
        $region21: #{tpu_custom_call.1} parent=19 // pred_check
          %p160 = pneg %p33
        $region22: #{tpu_custom_call.1} parent=19 // pred_check_branch
          %162 = sbr.rel (%p160) target = $region24
        $region23: #{tpu_custom_call.1} parent=19 // pred_region
          %s163 = smul.u32 4, %s13
          %p164 = scmp.lt.s32.totalorder %s163, 7
          %s165 = scalar_select %p164, %s163, 7
          %s166 = smul.addr %s165, 2
          %s167 = smul.addr %s166, 8
          %s168 = scalar_lea.vmem %s0, %s167
          %s169 = smul.u32 4, %s13
        $region24: #{tpu_custom_call.1} parent=19 // pred_fallthru
          _
        // Predicated region
        $region25: #{tpu_custom_call.1} parent=19 // pred_check
          %p170 = pneg %p59
        $region26: #{tpu_custom_call.1} parent=19 // pred_check_branch
          %172 = sbr.rel (%p170) target = $region28
        $region27: #{tpu_custom_call.1} parent=19 // pred_region
          %s173 = smul.u32 4, %s13
          %p174 = scmp.lt.s32.totalorder %s173, 7
          %s175 = scalar_select %p174, %s173, 7
          %s176 = smul.addr %s175, 2
          %s177 = smul.addr %s176, 8
          %s178 = scalar_lea.vmem %s1, %s177
          %s179 = smul.u32 4, %s13
        $region28: #{tpu_custom_call.1} parent=19 // pred_fallthru
          _
        // Predicated region
        $region29: #{tpu_custom_call.1} parent=19 // pred_check
          %p180 = pneg %p85
        $region30: #{tpu_custom_call.1} parent=19 // pred_check_branch
          %182 = sbr.rel (%p180) target = $region32
        $region31: #{tpu_custom_call.1} parent=19 // pred_region
          %s183 = smul.u32 4, %s13
          %p184 = scmp.lt.s32.totalorder %s183, 7
          %s185 = scalar_select %p184, %s183, 7
          %s186 = smul.addr %s185, 2
          %s187 = smul.addr %s186, 8
          %s188 = scalar_lea.vmem %s2, %s187
          %s189 = smul.u32 4, %s13
        $region32: #{tpu_custom_call.1} parent=19 // pred_fallthru
          _
      $region20: #{tpu_custom_call.1} parent=5 // pred_fallthru
        _
      %p190 = scmp.le.s32.totalorder 1, %s13
      %p191 = scmp.lt.s32.totalorder %s13, 3
      %p192 = pnand %p190, %p191
      %p193 = pneg %p192
      // Predicated region
      $region33: #{tpu_custom_call.1} parent=5 // pred_check
        _
      $region34: #{tpu_custom_call.1} parent=5 // pred_check_branch
        %195 = sbr.rel (%p192) target = $region36
      $region35: #{tpu_custom_call.1} parent=5 // pred_region
        %s196 = ssub.s32 %s13, 1
        %s197 = smul.u32 4, %s18
        %p198 = scmp.lt.s32.totalorder %s197, 7
        %s199 = scalar_select %p198, %s197, 7
        %s200 = smul.addr %s199, 2
        %s201 = smul.addr %s200, 8
        %s202 = scalar_lea.vmem %s0, %s201
        %p203 = pneg %p39
        %p204 = pneg %p36
        %s205 = smul.u32 4, %s18
        %p206 = scmp.lt.s32.totalorder %s205, 7
        %s207 = scalar_select %p206, %s205, 7
        %s208 = smul.addr %s207, 2
        %s209 = smul.addr %s208, 8
        %s210 = scalar_lea.vmem %s1, %s209
        %p211 = pneg %p65
        %p212 = pneg %p62
        %s213 = smul.u32 4, %s18
        %p214 = scmp.lt.s32.totalorder %s213, 7
        %s215 = scalar_select %p214, %s213, 7
        %s216 = smul.addr %s215, 2
        %s217 = smul.addr %s216, 8
        %s218 = scalar_lea.vmem %s2, %s217
        %p219 = pneg %p91
        %p220 = pneg %p88
        %p221 = pneg %p112
        %p222 = pneg %p109
        %p223 = pneg %p138
        %p224 = pneg %p135
        %s225 = sand.u32 %s125, 1
        %s226 = scalar_lea.sflag [#allocation3], %s225
        %s227 = sand.u32 %s125, 1
        %s228 = scalar_lea.vmem [#allocation2], %s227
        %s229 = smul.u32 4, %s18
        %p230 = scmp.lt.s32.totalorder %s229, 7
        %s231 = scalar_select %p230, %s229, 7
        %s232 = smul.addr %s231, 2
        %s233 = smul.addr %s232, 8
        %s234 = scalar_lea.vmem %s0, %s233
        %s235 = smul.u32 4, %s18
        %s236 = smul.u32 4, %s18
        %p237 = scmp.lt.s32.totalorder %s236, 7
        %s238 = scalar_select %p237, %s236, 7
        %s239 = smul.addr %s238, 2
        %s240 = smul.addr %s239, 8
        %s241 = scalar_lea.vmem %s1, %s240
        %s242 = smul.u32 4, %s18
        %s243 = smul.u32 4, %s18
        %p244 = scmp.lt.s32.totalorder %s243, 7
        %s245 = scalar_select %p244, %s243, 7
        %s246 = smul.addr %s245, 2
        %s247 = smul.addr %s246, 8
        %s248 = scalar_lea.vmem %s2, %s247
        %s249 = smul.u32 4, %s18
        %v250 = vld [vmem:[%s234] sm:$0xff]
        %v251 = vld [vmem:[%s234 + $0x8] sm:$0xff]
        %v252 = vld [vmem:[%s234 + $0x10] sm:$0xff]
        %v253 = vld [vmem:[%s234 + $0x18] sm:$0xff]
        %v254 = vld [vmem:[%s234 + $0x20] sm:$0xff]
        %v255 = vld [vmem:[%s234 + $0x28] sm:$0xff]
        %v256 = vld [vmem:[%s234 + $0x30] sm:$0xff]
        %v257 = vld [vmem:[%s234 + $0x38] sm:$0xff]
        %v258 = vld [vmem:[%s241] sm:$0xff]
        %v259 = vld [vmem:[%s241 + $0x8] sm:$0xff]
        %v260 = vld [vmem:[%s241 + $0x10] sm:$0xff]
        %v261 = vld [vmem:[%s241 + $0x18] sm:$0xff]
        %v262 = vld [vmem:[%s241 + $0x20] sm:$0xff]
        %v263 = vld [vmem:[%s241 + $0x28] sm:$0xff]
        %v264 = vld [vmem:[%s241 + $0x30] sm:$0xff]
        %v265 = vld [vmem:[%s241 + $0x38] sm:$0xff]
        %v266 = vld [vmem:[%s248] sm:$0xff]
        %v267 = vld [vmem:[%s248 + $0x8] sm:$0xff]
        %v268 = vld [vmem:[%s248 + $0x10] sm:$0xff]
        %v269 = vld [vmem:[%s248 + $0x18] sm:$0xff]
        %v270 = vld [vmem:[%s248 + $0x20] sm:$0xff]
        %v271 = vld [vmem:[%s248 + $0x28] sm:$0xff]
        %v272 = vld [vmem:[%s248 + $0x30] sm:$0xff]
        %v273 = vld [vmem:[%s248 + $0x38] sm:$0xff]
        %v274 = vld [vmem:[%s3] sm:$0xff]
        %v275 = vld [vmem:[%s3 + $0x8] sm:$0xff]
        %v276 = vld [vmem:[%s3 + $0x10] sm:$0xff]
        %v277 = vld [vmem:[%s3 + $0x18] sm:$0xff]
        %v278 = vld [vmem:[%s3 + $0x20] sm:$0xff]
        %v279 = vld [vmem:[%s3 + $0x28] sm:$0x1]
        %v280 = vld [vmem:[%s3 + $0x29] sm:$0x1]
        %v281 = vld [vmem:[%s3 + $0x2a] sm:$0x1]
        %v282 = vld [vmem:[%s3 + $0x2b] sm:$0x1]
        %v283 = vld [vmem:[%s3 + $0x2c] sm:$0x1]
        %v284 = vlaneseq
        %v285 = vshrl.u32 %v284, 7
        %v286 = vsub.s32 0, %v285
        %v287 = vrot.slane %v279, %v286
        %vm288 = vcmask 64512
        %v290 = vsel %vm288, %v250, 0
        %v293 = vsel %vm288, %v251, 0
        %v296 = vsel %vm288, %v252, 0
        %v299 = vsel %vm288, %v253, 0
        %v302 = vsel %vm288, %v254, 0
        %v305 = vsel %vm288, %v255, 0
        %v308 = vsel %vm288, %v256, 0
        %v311 = vsel %vm288, %v257, 0
        %313 = vmatprep.subr.mxu0 0.0
        %314 = vmatpush1.msra.mxu0 %v274
        %315 = vmatprep.subr.mxu0 0.0
        %316 = vmatpush1.msra.mxu0 0.0
        %317 = vmatprep.subr.mxu0 0.0
        %318 = vmatpush1.msra.mxu0 0.0
        %319 = vmatprep.subr.mxu0 0.0
        %320 = vmatpush1.msra.mxu0 0.0
        %321 = vmatprep.subr.mxu0 0.0
        %322 = vmatpush1.msra.mxu0 0.0
        %323 = vmatprep.subr.mxu0 0.0
        %324 = vmatpush1.msra.mxu0 0.0
        %325 = vmatprep.subr.mxu0 0.0
        %326 = vmatpush1.msra.mxu0 0.0
        %327 = vmatprep.subr.mxu0 0.0
        %328 = vmatpush1.msra.mxu0 0.0
        %329 = vmatprep.subr.mxu0 0.0
        %330 = vmatpush1.msra.mxu0 0.0
        %331 = vmatprep.subr.mxu0 0.0
        %332 = vmatpush1.msra.mxu0 0.0
        %333 = vmatprep.subr.mxu0 0.0
        %334 = vmatpush1.msra.mxu0 0.0
        %335 = vmatprep.subr.mxu0 0.0
        %336 = vmatpush1.msra.mxu0 0.0
        %337 = vmatprep.subr.mxu0 0.0
        %338 = vmatpush1.msra.mxu0 0.0
        %339 = vmatprep.subr.mxu0 0.0
        %340 = vmatpush1.msra.mxu0 0.0
        %341 = vmatprep.subr.mxu0 0.0
        %342 = vmatpush1.msra.mxu0 0.0
        %343 = vmatprep.subr.mxu0 0.0
        %344 = vmatpush1.msra.mxu0 0.0
        %345 = vmatprep.subr.mxu0 0.0
        %346 = vmatpush1.msra.mxu0 0.0
        %347 = vmatprep.subr.mxu0 0.0
        %348 = vmatpush1.msra.mxu0 0.0
        %349 = vmatprep.subr.mxu0 0.0
        %350 = vmatpush1.msra.mxu0 0.0
        %351 = vmatprep.subr.mxu0 0.0
        %352 = vmatpush1.msra.mxu0 0.0
        %353 = vmatprep.subr.mxu0 0.0
        %354 = vmatpush1.msra.mxu0 0.0
        %355 = vmatprep.subr.mxu0 0.0
        %356 = vmatpush1.msra.mxu0 0.0
        %357 = vmatprep.subr.mxu0 0.0
        %358 = vmatpush1.msra.mxu0 0.0
        %359 = vmatprep.subr.mxu0 0.0
        %360 = vmatpush1.msra.mxu0 0.0
        %361 = vmatprep.subr.mxu0 0.0
        %362 = vmatpush1.msra.mxu0 0.0
        %363 = vmatprep.subr.mxu0 0.0
        %364 = vmatpush1.msra.mxu0 0.0
        %365 = vmatprep.subr.mxu0 0.0
        %366 = vmatpush1.msra.mxu0 0.0
        %367 = vmatprep.subr.mxu0 0.0
        %368 = vmatpush1.msra.mxu0 0.0
        %369 = vmatprep.subr.mxu0 0.0
        %370 = vmatpush1.msra.mxu0 0.0
        %371 = vmatprep.subr.mxu0 0.0
        %372 = vmatpush1.msra.mxu0 0.0
        %373 = vmatprep.subr.mxu0 0.0
        %374 = vmatpush1.msra.mxu0 0.0
        %375 = vmatprep.subr.mxu0 0.0
        %376 = vmatpush1.msra.mxu0 0.0
        %377 = vmatprep.mubr.f32.mxu0 0.0
        %378 = vmatmul.mubr.f32.gmra.mrb[0].mxu0 %v290
        %v379 = vpop.f32.mrb[0].mxu0
        %v380 = vadd.f32 %v287, %v379
        %v381 = vpop.f32.mrb[0].mxu0
        %382 = vmatprep.mubr.f32.mxu0 0.0
        %383 = vmatmul.mubr.f32.gmra.mrb[0].mxu0 %v293
        %v384 = vpop.f32.mrb[0].mxu0
        %v385 = vadd.f32 %v287, %v384
        %v386 = vpop.f32.mrb[0].mxu0
        %387 = vmatprep.mubr.f32.mxu0 0.0
        %388 = vmatmul.mubr.f32.gmra.mrb[0].mxu0 %v296
        %v389 = vpop.f32.mrb[0].mxu0
        %v390 = vadd.f32 %v287, %v389
        %v391 = vpop.f32.mrb[0].mxu0
        %392 = vmatprep.mubr.f32.mxu0 0.0
        %393 = vmatmul.mubr.f32.gmra.mrb[0].mxu0 %v299
        %v394 = vpop.f32.mrb[0].mxu0
        %v395 = vadd.f32 %v287, %v394
        %v396 = vpop.f32.mrb[0].mxu0
        %397 = vmatprep.mubr.f32.mxu0 0.0
        %398 = vmatmul.mubr.f32.gmra.mrb[0].mxu0 %v302
        %v399 = vpop.f32.mrb[0].mxu0
        %v400 = vadd.f32 %v287, %v399
        %v401 = vpop.f32.mrb[0].mxu0
        %402 = vmatprep.mubr.f32.mxu0 0.0
        %403 = vmatmul.mubr.f32.gmra.mrb[0].mxu0 %v305
        %v404 = vpop.f32.mrb[0].mxu0
        %v405 = vadd.f32 %v287, %v404
        %v406 = vpop.f32.mrb[0].mxu0
        %407 = vmatprep.mubr.f32.mxu0 0.0
        %408 = vmatmul.mubr.f32.gmra.mrb[0].mxu0 %v308
        %v409 = vpop.f32.mrb[0].mxu0
        %v410 = vadd.f32 %v287, %v409
        %v411 = vpop.f32.mrb[0].mxu0
        %412 = vmatprep.mubr.f32.mxu0 0.0
        %413 = vmatmul.mubr.f32.gmra.mrb[0].mxu0 %v311
        %v414 = vpop.f32.mrb[0].mxu0
        %v415 = vadd.f32 %v287, %v414
        %v416 = vpop.f32.mrb[0].mxu0
        %417 = vdwg.mxu0
        %418 = vxpose.xlu0.b32.start [1/16] %v258, 128
        %419 = vxpose.xlu0.b32.cont [2/16] %v259, 128
        %420 = vxpose.xlu0.b32.cont [3/16] 0.0, 128
        %421 = vxpose.xlu0.b32.cont [4/16] 0.0, 128
        %422 = vxpose.xlu0.b32.cont [5/16] 0.0, 128
        %423 = vxpose.xlu0.b32.cont [6/16] 0.0, 128
        %424 = vxpose.xlu0.b32.cont [7/16] 0.0, 128
        %425 = vxpose.xlu0.b32.cont [8/16] 0.0, 128
        %426 = vxpose.xlu0.b32.cont [9/16] 0.0, 128
        %427 = vxpose.xlu0.b32.cont [10/16] 0.0, 128
        %428 = vxpose.xlu0.b32.cont [11/16] 0.0, 128
        %429 = vxpose.xlu0.b32.cont [12/16] 0.0, 128
        %430 = vxpose.xlu0.b32.cont [13/16] 0.0, 128
        %431 = vxpose.xlu0.b32.cont [14/16] 0.0, 128
        %432 = vxpose.xlu0.b32.cont [15/16] 0.0, 128
        %433 = vxpose.xlu0.b32.end [16/16] 0.0, 128
        %v434 = vpop.trf.xlu0
        %v435 = vpop.trf.xlu0
        %v436 = vpop.trf.xlu0
        %v437 = vpop.trf.xlu0
        %v438 = vpop.trf.xlu0
        %v439 = vpop.trf.xlu0
        %v440 = vpop.trf.xlu0
        %v441 = vpop.trf.xlu0
        %v442 = vpop.trf.xlu0
        %v443 = vpop.trf.xlu0
        %v444 = vpop.trf.xlu0
        %v445 = vpop.trf.xlu0
        %v446 = vpop.trf.xlu0
        %v447 = vpop.trf.xlu0
        %v448 = vpop.trf.xlu0
        %v449 = vpop.trf.xlu0
        %vm450 = vcmask 130048
        %v452 = vsel %vm450, %v434, 0
        %v455 = vsel %vm450, %v435, 0
        %457 = vmatprep.subr.mxu0 0.0
        %458 = vmatpush1.msra.mxu0 %v380
        %459 = vmatprep.subr.mxu0 0.0
        %460 = vmatpush1.msra.mxu0 %v385
        %461 = vmatprep.subr.mxu0 0.0
        %462 = vmatpush1.msra.mxu0 0.0
        %463 = vmatprep.subr.mxu0 0.0
        %464 = vmatpush1.msra.mxu0 0.0
        %465 = vmatprep.subr.mxu0 0.0
        %466 = vmatpush1.msra.mxu0 0.0
        %467 = vmatprep.subr.mxu0 0.0
        %468 = vmatpush1.msra.mxu0 0.0
        %469 = vmatprep.subr.mxu0 0.0
        %470 = vmatpush1.msra.mxu0 0.0
        %471 = vmatprep.subr.mxu0 0.0
        %472 = vmatpush1.msra.mxu0 0.0
        %473 = vmatprep.subr.mxu0 0.0
        %474 = vmatpush1.msra.mxu0 0.0
        %475 = vmatprep.subr.mxu0 0.0
        %476 = vmatpush1.msra.mxu0 0.0
        %477 = vmatprep.subr.mxu0 0.0
        %478 = vmatpush1.msra.mxu0 0.0
        %479 = vmatprep.subr.mxu0 0.0
        %480 = vmatpush1.msra.mxu0 0.0
        %481 = vmatprep.subr.mxu0 0.0
        %482 = vmatpush1.msra.mxu0 0.0
        %483 = vmatprep.subr.mxu0 0.0
        %484 = vmatpush1.msra.mxu0 0.0
        %485 = vmatprep.subr.mxu0 0.0
        %486 = vmatpush1.msra.mxu0 0.0
        %487 = vmatprep.subr.mxu0 0.0
        %488 = vmatpush1.msra.mxu0 0.0
        %489 = vmatprep.subr.mxu0 0.0
        %490 = vmatpush1.msra.mxu0 0.0
        %491 = vmatprep.subr.mxu0 0.0
        %492 = vmatpush1.msra.mxu0 0.0
        %493 = vmatprep.subr.mxu0 0.0
        %494 = vmatpush1.msra.mxu0 0.0
        %495 = vmatprep.subr.mxu0 0.0
        %496 = vmatpush1.msra.mxu0 0.0
        %497 = vmatprep.subr.mxu0 0.0
        %498 = vmatpush1.msra.mxu0 0.0
        %499 = vmatprep.subr.mxu0 0.0
        %500 = vmatpush1.msra.mxu0 0.0
        %501 = vmatprep.subr.mxu0 0.0
        %502 = vmatpush1.msra.mxu0 0.0
        %503 = vmatprep.subr.mxu0 0.0
        %504 = vmatpush1.msra.mxu0 0.0
        %505 = vmatprep.subr.mxu0 0.0
        %506 = vmatpush1.msra.mxu0 0.0
        %507 = vmatprep.subr.mxu0 0.0
        %508 = vmatpush1.msra.mxu0 0.0
        %509 = vmatprep.subr.mxu0 0.0
        %510 = vmatpush1.msra.mxu0 0.0
        %511 = vmatprep.subr.mxu0 0.0
        %512 = vmatpush1.msra.mxu0 0.0
        %513 = vmatprep.subr.mxu0 0.0
        %514 = vmatpush1.msra.mxu0 0.0
        %515 = vmatprep.subr.mxu0 0.0
        %516 = vmatpush1.msra.mxu0 0.0
        %517 = vmatprep.subr.mxu0 0.0
        %518 = vmatpush1.msra.mxu0 0.0
        %519 = vmatprep.subr.mxu0 0.0
        %520 = vmatpush1.msra.mxu0 0.0
        %521 = vmatprep.mubr.f32.mxu0 0.0
        %522 = vmatmul.mubr.f32.gmra.mrb[0].mxu0 %v452
        %v523 = vpop.f32.mrb[0].mxu0
        %v524 = vadd.f32 0.0, %v523
        %v525 = vpop.f32.mrb[0].mxu0
        %526 = vmatprep.mubr.f32.mxu0 0.0
        %527 = vmatmul.mubr.f32.gmra.mrb[0].mxu0 %v455
        %v528 = vpop.f32.mrb[0].mxu0
        %v529 = vadd.f32 0.0, %v528
        %v530 = vpop.f32.mrb[0].mxu0
        %531 = vdwg.mxu0
        %532 = vxpose.xlu0.b32.start [1/16] %v260, 128
        %533 = vxpose.xlu0.b32.cont [2/16] %v261, 128
        %534 = vxpose.xlu0.b32.cont [3/16] 0.0, 128
        %535 = vxpose.xlu0.b32.cont [4/16] 0.0, 128
        %536 = vxpose.xlu0.b32.cont [5/16] 0.0, 128
        %537 = vxpose.xlu0.b32.cont [6/16] 0.0, 128
        %538 = vxpose.xlu0.b32.cont [7/16] 0.0, 128
        %539 = vxpose.xlu0.b32.cont [8/16] 0.0, 128
        %540 = vxpose.xlu0.b32.cont [9/16] 0.0, 128
        %541 = vxpose.xlu0.b32.cont [10/16] 0.0, 128
        %542 = vxpose.xlu0.b32.cont [11/16] 0.0, 128
        %543 = vxpose.xlu0.b32.cont [12/16] 0.0, 128
        %544 = vxpose.xlu0.b32.cont [13/16] 0.0, 128
        %545 = vxpose.xlu0.b32.cont [14/16] 0.0, 128
        %546 = vxpose.xlu0.b32.cont [15/16] 0.0, 128
        %547 = vxpose.xlu0.b32.end [16/16] 0.0, 128
        %v548 = vpop.trf.xlu0
        %v549 = vpop.trf.xlu0
        %v550 = vpop.trf.xlu0
        %v551 = vpop.trf.xlu0
        %v552 = vpop.trf.xlu0
        %v553 = vpop.trf.xlu0
        %v554 = vpop.trf.xlu0
        %v555 = vpop.trf.xlu0
        %v556 = vpop.trf.xlu0
        %v557 = vpop.trf.xlu0
        %v558 = vpop.trf.xlu0
        %v559 = vpop.trf.xlu0
        %v560 = vpop.trf.xlu0
        %v561 = vpop.trf.xlu0
        %v562 = vpop.trf.xlu0
        %v563 = vpop.trf.xlu0
        %v565 = vsel %vm450, %v548, 0
        %v568 = vsel %vm450, %v549, 0
        %570 = vmatprep.subr.mxu0 0.0
        %571 = vmatpush1.msra.mxu0 %v390
        %572 = vmatprep.subr.mxu0 0.0
        %573 = vmatpush1.msra.mxu0 %v395
        %574 = vmatprep.subr.mxu0 0.0
        %575 = vmatpush1.msra.mxu0 0.0
        %576 = vmatprep.subr.mxu0 0.0
        %577 = vmatpush1.msra.mxu0 0.0
        %578 = vmatprep.subr.mxu0 0.0
        %579 = vmatpush1.msra.mxu0 0.0
        %580 = vmatprep.subr.mxu0 0.0
        %581 = vmatpush1.msra.mxu0 0.0
        %582 = vmatprep.subr.mxu0 0.0
        %583 = vmatpush1.msra.mxu0 0.0
        %584 = vmatprep.subr.mxu0 0.0
        %585 = vmatpush1.msra.mxu0 0.0
        %586 = vmatprep.subr.mxu0 0.0
        %587 = vmatpush1.msra.mxu0 0.0
        %588 = vmatprep.subr.mxu0 0.0
        %589 = vmatpush1.msra.mxu0 0.0
        %590 = vmatprep.subr.mxu0 0.0
        %591 = vmatpush1.msra.mxu0 0.0
        %592 = vmatprep.subr.mxu0 0.0
        %593 = vmatpush1.msra.mxu0 0.0
        %594 = vmatprep.subr.mxu0 0.0
        %595 = vmatpush1.msra.mxu0 0.0
        %596 = vmatprep.subr.mxu0 0.0
        %597 = vmatpush1.msra.mxu0 0.0
        %598 = vmatprep.subr.mxu0 0.0
        %599 = vmatpush1.msra.mxu0 0.0
        %600 = vmatprep.subr.mxu0 0.0
        %601 = vmatpush1.msra.mxu0 0.0
        %602 = vmatprep.subr.mxu0 0.0
        %603 = vmatpush1.msra.mxu0 0.0
        %604 = vmatprep.subr.mxu0 0.0
        %605 = vmatpush1.msra.mxu0 0.0
        %606 = vmatprep.subr.mxu0 0.0
        %607 = vmatpush1.msra.mxu0 0.0
        %608 = vmatprep.subr.mxu0 0.0
        %609 = vmatpush1.msra.mxu0 0.0
        %610 = vmatprep.subr.mxu0 0.0
        %611 = vmatpush1.msra.mxu0 0.0
        %612 = vmatprep.subr.mxu0 0.0
        %613 = vmatpush1.msra.mxu0 0.0
        %614 = vmatprep.subr.mxu0 0.0
        %615 = vmatpush1.msra.mxu0 0.0
        %616 = vmatprep.subr.mxu0 0.0
        %617 = vmatpush1.msra.mxu0 0.0
        %618 = vmatprep.subr.mxu0 0.0
        %619 = vmatpush1.msra.mxu0 0.0
        %620 = vmatprep.subr.mxu0 0.0
        %621 = vmatpush1.msra.mxu0 0.0
        %622 = vmatprep.subr.mxu0 0.0
        %623 = vmatpush1.msra.mxu0 0.0
        %624 = vmatprep.subr.mxu0 0.0
        %625 = vmatpush1.msra.mxu0 0.0
        %626 = vmatprep.subr.mxu0 0.0
        %627 = vmatpush1.msra.mxu0 0.0
        %628 = vmatprep.subr.mxu0 0.0
        %629 = vmatpush1.msra.mxu0 0.0
        %630 = vmatprep.subr.mxu0 0.0
        %631 = vmatpush1.msra.mxu0 0.0
        %632 = vmatprep.subr.mxu0 0.0
        %633 = vmatpush1.msra.mxu0 0.0
        %634 = vmatprep.mubr.f32.mxu0 0.0
        %635 = vmatmul.mubr.f32.gmra.mrb[0].mxu0 %v565
        %v636 = vpop.f32.mrb[0].mxu0
        %v637 = vadd.f32 0.0, %v636
        %v638 = vpop.f32.mrb[0].mxu0
        %639 = vmatprep.mubr.f32.mxu0 0.0
        %640 = vmatmul.mubr.f32.gmra.mrb[0].mxu0 %v568
        %v641 = vpop.f32.mrb[0].mxu0
        %v642 = vadd.f32 0.0, %v641
        %v643 = vpop.f32.mrb[0].mxu0
        %644 = vdwg.mxu0
        %645 = vxpose.xlu0.b32.start [1/16] %v262, 128
        %646 = vxpose.xlu0.b32.cont [2/16] %v263, 128
        %647 = vxpose.xlu0.b32.cont [3/16] 0.0, 128
        %648 = vxpose.xlu0.b32.cont [4/16] 0.0, 128
        %649 = vxpose.xlu0.b32.cont [5/16] 0.0, 128
        %650 = vxpose.xlu0.b32.cont [6/16] 0.0, 128
        %651 = vxpose.xlu0.b32.cont [7/16] 0.0, 128
        %652 = vxpose.xlu0.b32.cont [8/16] 0.0, 128
        %653 = vxpose.xlu0.b32.cont [9/16] 0.0, 128
        %654 = vxpose.xlu0.b32.cont [10/16] 0.0, 128
        %655 = vxpose.xlu0.b32.cont [11/16] 0.0, 128
        %656 = vxpose.xlu0.b32.cont [12/16] 0.0, 128
        %657 = vxpose.xlu0.b32.cont [13/16] 0.0, 128
        %658 = vxpose.xlu0.b32.cont [14/16] 0.0, 128
        %659 = vxpose.xlu0.b32.cont [15/16] 0.0, 128
        %660 = vxpose.xlu0.b32.end [16/16] 0.0, 128
        %v661 = vpop.trf.xlu0
        %v662 = vpop.trf.xlu0
        %v663 = vpop.trf.xlu0
        %v664 = vpop.trf.xlu0
        %v665 = vpop.trf.xlu0
        %v666 = vpop.trf.xlu0
        %v667 = vpop.trf.xlu0
        %v668 = vpop.trf.xlu0
        %v669 = vpop.trf.xlu0
        %v670 = vpop.trf.xlu0
        %v671 = vpop.trf.xlu0
        %v672 = vpop.trf.xlu0
        %v673 = vpop.trf.xlu0
        %v674 = vpop.trf.xlu0
        %v675 = vpop.trf.xlu0
        %v676 = vpop.trf.xlu0
        %v678 = vsel %vm450, %v661, 0
        %v681 = vsel %vm450, %v662, 0
        %683 = vmatprep.subr.mxu0 0.0
        %684 = vmatpush1.msra.mxu0 %v400
        %685 = vmatprep.subr.mxu0 0.0
        %686 = vmatpush1.msra.mxu0 %v405
        %687 = vmatprep.subr.mxu0 0.0
        %688 = vmatpush1.msra.mxu0 0.0
        %689 = vmatprep.subr.mxu0 0.0
        %690 = vmatpush1.msra.mxu0 0.0
        %691 = vmatprep.subr.mxu0 0.0
        %692 = vmatpush1.msra.mxu0 0.0
        %693 = vmatprep.subr.mxu0 0.0
        %694 = vmatpush1.msra.mxu0 0.0
        %695 = vmatprep.subr.mxu0 0.0
        %696 = vmatpush1.msra.mxu0 0.0
        %697 = vmatprep.subr.mxu0 0.0
        %698 = vmatpush1.msra.mxu0 0.0
        %699 = vmatprep.subr.mxu0 0.0
        %700 = vmatpush1.msra.mxu0 0.0
        %701 = vmatprep.subr.mxu0 0.0
        %702 = vmatpush1.msra.mxu0 0.0
        %703 = vmatprep.subr.mxu0 0.0
        %704 = vmatpush1.msra.mxu0 0.0
        %705 = vmatprep.subr.mxu0 0.0
        %706 = vmatpush1.msra.mxu0 0.0
        %707 = vmatprep.subr.mxu0 0.0
        %708 = vmatpush1.msra.mxu0 0.0
        %709 = vmatprep.subr.mxu0 0.0
        %710 = vmatpush1.msra.mxu0 0.0
        %711 = vmatprep.subr.mxu0 0.0
        %712 = vmatpush1.msra.mxu0 0.0
        %713 = vmatprep.subr.mxu0 0.0
        %714 = vmatpush1.msra.mxu0 0.0
        %715 = vmatprep.subr.mxu0 0.0
        %716 = vmatpush1.msra.mxu0 0.0
        %717 = vmatprep.subr.mxu0 0.0
        %718 = vmatpush1.msra.mxu0 0.0
        %719 = vmatprep.subr.mxu0 0.0
        %720 = vmatpush1.msra.mxu0 0.0
        %721 = vmatprep.subr.mxu0 0.0
        %722 = vmatpush1.msra.mxu0 0.0
        %723 = vmatprep.subr.mxu0 0.0
        %724 = vmatpush1.msra.mxu0 0.0
        %725 = vmatprep.subr.mxu0 0.0
        %726 = vmatpush1.msra.mxu0 0.0
        %727 = vmatprep.subr.mxu0 0.0
        %728 = vmatpush1.msra.mxu0 0.0
        %729 = vmatprep.subr.mxu0 0.0
        %730 = vmatpush1.msra.mxu0 0.0
        %731 = vmatprep.subr.mxu0 0.0
        %732 = vmatpush1.msra.mxu0 0.0
        %733 = vmatprep.subr.mxu0 0.0
        %734 = vmatpush1.msra.mxu0 0.0
        %735 = vmatprep.subr.mxu0 0.0
        %736 = vmatpush1.msra.mxu0 0.0
        %737 = vmatprep.subr.mxu0 0.0
        %738 = vmatpush1.msra.mxu0 0.0
        %739 = vmatprep.subr.mxu0 0.0
        %740 = vmatpush1.msra.mxu0 0.0
        %741 = vmatprep.subr.mxu0 0.0
        %742 = vmatpush1.msra.mxu0 0.0
        %743 = vmatprep.subr.mxu0 0.0
        %744 = vmatpush1.msra.mxu0 0.0
        %745 = vmatprep.subr.mxu0 0.0
        %746 = vmatpush1.msra.mxu0 0.0
        %747 = vmatprep.mubr.f32.mxu0 0.0
        %748 = vmatmul.mubr.f32.gmra.mrb[0].mxu0 %v678
        %v749 = vpop.f32.mrb[0].mxu0
        %v750 = vadd.f32 0.0, %v749
        %v751 = vpop.f32.mrb[0].mxu0
        %752 = vmatprep.mubr.f32.mxu0 0.0
        %753 = vmatmul.mubr.f32.gmra.mrb[0].mxu0 %v681
        %v754 = vpop.f32.mrb[0].mxu0
        %v755 = vadd.f32 0.0, %v754
        %v756 = vpop.f32.mrb[0].mxu0
        %757 = vdwg.mxu0
        %758 = vxpose.xlu0.b32.start [1/16] %v264, 128
        %759 = vxpose.xlu0.b32.cont [2/16] %v265, 128
        %760 = vxpose.xlu0.b32.cont [3/16] 0.0, 128
        %761 = vxpose.xlu0.b32.cont [4/16] 0.0, 128
        %762 = vxpose.xlu0.b32.cont [5/16] 0.0, 128
        %763 = vxpose.xlu0.b32.cont [6/16] 0.0, 128
        %764 = vxpose.xlu0.b32.cont [7/16] 0.0, 128
        %765 = vxpose.xlu0.b32.cont [8/16] 0.0, 128
        %766 = vxpose.xlu0.b32.cont [9/16] 0.0, 128
        %767 = vxpose.xlu0.b32.cont [10/16] 0.0, 128
        %768 = vxpose.xlu0.b32.cont [11/16] 0.0, 128
        %769 = vxpose.xlu0.b32.cont [12/16] 0.0, 128
        %770 = vxpose.xlu0.b32.cont [13/16] 0.0, 128
        %771 = vxpose.xlu0.b32.cont [14/16] 0.0, 128
        %772 = vxpose.xlu0.b32.cont [15/16] 0.0, 128
        %773 = vxpose.xlu0.b32.end [16/16] 0.0, 128
        %v774 = vpop.trf.xlu0
        %v775 = vpop.trf.xlu0
        %v776 = vpop.trf.xlu0
        %v777 = vpop.trf.xlu0
        %v778 = vpop.trf.xlu0
        %v779 = vpop.trf.xlu0
        %v780 = vpop.trf.xlu0
        %v781 = vpop.trf.xlu0
        %v782 = vpop.trf.xlu0
        %v783 = vpop.trf.xlu0
        %v784 = vpop.trf.xlu0
        %v785 = vpop.trf.xlu0
        %v786 = vpop.trf.xlu0
        %v787 = vpop.trf.xlu0
        %v788 = vpop.trf.xlu0
        %v789 = vpop.trf.xlu0
        %v791 = vsel %vm450, %v774, 0
        %v794 = vsel %vm450, %v775, 0
        %796 = vmatprep.subr.mxu0 0.0
        %797 = vmatpush1.msra.mxu0 %v410
        %798 = vmatprep.subr.mxu0 0.0
        %799 = vmatpush1.msra.mxu0 %v415
        %800 = vmatprep.subr.mxu0 0.0
        %801 = vmatpush1.msra.mxu0 0.0
        %802 = vmatprep.subr.mxu0 0.0
        %803 = vmatpush1.msra.mxu0 0.0
        %804 = vmatprep.subr.mxu0 0.0
        %805 = vmatpush1.msra.mxu0 0.0
        %806 = vmatprep.subr.mxu0 0.0
        %807 = vmatpush1.msra.mxu0 0.0
        %808 = vmatprep.subr.mxu0 0.0
        %809 = vmatpush1.msra.mxu0 0.0
        %810 = vmatprep.subr.mxu0 0.0
        %811 = vmatpush1.msra.mxu0 0.0
        %812 = vmatprep.subr.mxu0 0.0
        %813 = vmatpush1.msra.mxu0 0.0
        %814 = vmatprep.subr.mxu0 0.0
        %815 = vmatpush1.msra.mxu0 0.0
        %816 = vmatprep.subr.mxu0 0.0
        %817 = vmatpush1.msra.mxu0 0.0
        %818 = vmatprep.subr.mxu0 0.0
        %819 = vmatpush1.msra.mxu0 0.0
        %820 = vmatprep.subr.mxu0 0.0
        %821 = vmatpush1.msra.mxu0 0.0
        %822 = vmatprep.subr.mxu0 0.0
        %823 = vmatpush1.msra.mxu0 0.0
        %824 = vmatprep.subr.mxu0 0.0
        %825 = vmatpush1.msra.mxu0 0.0
        %826 = vmatprep.subr.mxu0 0.0
        %827 = vmatpush1.msra.mxu0 0.0
        %828 = vmatprep.subr.mxu0 0.0
        %829 = vmatpush1.msra.mxu0 0.0
        %830 = vmatprep.subr.mxu0 0.0
        %831 = vmatpush1.msra.mxu0 0.0
        %832 = vmatprep.subr.mxu0 0.0
        %833 = vmatpush1.msra.mxu0 0.0
        %834 = vmatprep.subr.mxu0 0.0
        %835 = vmatpush1.msra.mxu0 0.0
        %836 = vmatprep.subr.mxu0 0.0
        %837 = vmatpush1.msra.mxu0 0.0
        %838 = vmatprep.subr.mxu0 0.0
        %839 = vmatpush1.msra.mxu0 0.0
        %840 = vmatprep.subr.mxu0 0.0
        %841 = vmatpush1.msra.mxu0 0.0
        %842 = vmatprep.subr.mxu0 0.0
        %843 = vmatpush1.msra.mxu0 0.0
        %844 = vmatprep.subr.mxu0 0.0
        %845 = vmatpush1.msra.mxu0 0.0
        %846 = vmatprep.subr.mxu0 0.0
        %847 = vmatpush1.msra.mxu0 0.0
        %848 = vmatprep.subr.mxu0 0.0
        %849 = vmatpush1.msra.mxu0 0.0
        %850 = vmatprep.subr.mxu0 0.0
        %851 = vmatpush1.msra.mxu0 0.0
        %852 = vmatprep.subr.mxu0 0.0
        %853 = vmatpush1.msra.mxu0 0.0
        %854 = vmatprep.subr.mxu0 0.0
        %855 = vmatpush1.msra.mxu0 0.0
        %856 = vmatprep.subr.mxu0 0.0
        %857 = vmatpush1.msra.mxu0 0.0
        %858 = vmatprep.subr.mxu0 0.0
        %859 = vmatpush1.msra.mxu0 0.0
        %860 = vmatprep.mubr.f32.mxu0 0.0
        %861 = vmatmul.mubr.f32.gmra.mrb[0].mxu0 %v791
        %v862 = vpop.f32.mrb[0].mxu0
        %v863 = vadd.f32 0.0, %v862
        %v864 = vpop.f32.mrb[0].mxu0
        %865 = vmatprep.mubr.f32.mxu0 0.0
        %866 = vmatmul.mubr.f32.gmra.mrb[0].mxu0 %v794
        %v867 = vpop.f32.mrb[0].mxu0
        %v868 = vadd.f32 0.0, %v867
        %v869 = vpop.f32.mrb[0].mxu0
        %870 = vdwg.mxu0
        %vm871 = vcmask 97280
        %v873 = vsel %vm871, %v258, 0
        %v876 = vsel %vm871, %v259, 0
        %vm878 = vcmask 1043456
        %v880 = vsel %vm878, %v529, 0
        %882 = vmatprep.subr.mxu0 0.0
        %883 = vmatpush1.msra.mxu0 %v524
        %884 = vmatprep.subr.mxu0 0.0
        %885 = vmatpush1.msra.mxu0 %v880
        %886 = vmatprep.subr.mxu0 0.0
        %887 = vmatpush1.msra.mxu0 0.0
        %888 = vmatprep.subr.mxu0 0.0
        %889 = vmatpush1.msra.mxu0 0.0
        %890 = vmatprep.subr.mxu0 0.0
        %891 = vmatpush1.msra.mxu0 0.0
        %892 = vmatprep.subr.mxu0 0.0
        %893 = vmatpush1.msra.mxu0 0.0
        %894 = vmatprep.subr.mxu0 0.0
        %895 = vmatpush1.msra.mxu0 0.0
        %896 = vmatprep.subr.mxu0 0.0
        %897 = vmatpush1.msra.mxu0 0.0
        %898 = vmatprep.subr.mxu0 0.0
        %899 = vmatpush1.msra.mxu0 0.0
        %900 = vmatprep.subr.mxu0 0.0
        %901 = vmatpush1.msra.mxu0 0.0
        %902 = vmatprep.subr.mxu0 0.0
        %903 = vmatpush1.msra.mxu0 0.0
        %904 = vmatprep.subr.mxu0 0.0
        %905 = vmatpush1.msra.mxu0 0.0
        %906 = vmatprep.subr.mxu0 0.0
        %907 = vmatpush1.msra.mxu0 0.0
        %908 = vmatprep.subr.mxu0 0.0
        %909 = vmatpush1.msra.mxu0 0.0
        %910 = vmatprep.subr.mxu0 0.0
        %911 = vmatpush1.msra.mxu0 0.0
        %912 = vmatprep.subr.mxu0 0.0
        %913 = vmatpush1.msra.mxu0 0.0
        %914 = vmatprep.subr.mxu0 0.0
        %915 = vmatpush1.msra.mxu0 0.0
        %916 = vmatprep.subr.mxu0 0.0
        %917 = vmatpush1.msra.mxu0 0.0
        %918 = vmatprep.subr.mxu0 0.0
        %919 = vmatpush1.msra.mxu0 0.0
        %920 = vmatprep.subr.mxu0 0.0
        %921 = vmatpush1.msra.mxu0 0.0
        %922 = vmatprep.subr.mxu0 0.0
        %923 = vmatpush1.msra.mxu0 0.0
        %924 = vmatprep.subr.mxu0 0.0
        %925 = vmatpush1.msra.mxu0 0.0
        %926 = vmatprep.subr.mxu0 0.0
        %927 = vmatpush1.msra.mxu0 0.0
        %928 = vmatprep.subr.mxu0 0.0
        %929 = vmatpush1.msra.mxu0 0.0
        %930 = vmatprep.subr.mxu0 0.0
        %931 = vmatpush1.msra.mxu0 0.0
        %932 = vmatprep.subr.mxu0 0.0
        %933 = vmatpush1.msra.mxu0 0.0
        %934 = vmatprep.subr.mxu0 0.0
        %935 = vmatpush1.msra.mxu0 0.0
        %936 = vmatprep.subr.mxu0 0.0
        %937 = vmatpush1.msra.mxu0 0.0
        %938 = vmatprep.subr.mxu0 0.0
        %939 = vmatpush1.msra.mxu0 0.0
        %940 = vmatprep.subr.mxu0 0.0
        %941 = vmatpush1.msra.mxu0 0.0
        %942 = vmatprep.subr.mxu0 0.0
        %943 = vmatpush1.msra.mxu0 0.0
        %944 = vmatprep.subr.mxu0 0.0
        %945 = vmatpush1.msra.mxu0 0.0
        %946 = vmatprep.mubr.f32.mxu0 0.0
        %947 = vmatmul.mubr.f32.gmra.mrb[0].mxu0 %v873
        %v948 = vpop.f32.mrb[0].mxu0
        %v949 = vadd.f32 0.0, %v948
        %v950 = vpop.f32.mrb[0].mxu0
        %951 = vmatprep.mubr.f32.mxu0 0.0
        %952 = vmatmul.mubr.f32.gmra.mrb[0].mxu0 %v876
        %v953 = vpop.f32.mrb[0].mxu0
        %v954 = vadd.f32 0.0, %v953
        %v955 = vpop.f32.mrb[0].mxu0
        %956 = vdwg.mxu0
        %v958 = vsel %vm871, %v260, 0
        %v961 = vsel %vm871, %v261, 0
        %v964 = vsel %vm878, %v642, 0
        %966 = vmatprep.subr.mxu0 0.0
        %967 = vmatpush1.msra.mxu0 %v637
        %968 = vmatprep.subr.mxu0 0.0
        %969 = vmatpush1.msra.mxu0 %v964
        %970 = vmatprep.subr.mxu0 0.0
        %971 = vmatpush1.msra.mxu0 0.0
        %972 = vmatprep.subr.mxu0 0.0
        %973 = vmatpush1.msra.mxu0 0.0
        %974 = vmatprep.subr.mxu0 0.0
        %975 = vmatpush1.msra.mxu0 0.0
        %976 = vmatprep.subr.mxu0 0.0
        %977 = vmatpush1.msra.mxu0 0.0
        %978 = vmatprep.subr.mxu0 0.0
        %979 = vmatpush1.msra.mxu0 0.0
        %980 = vmatprep.subr.mxu0 0.0
        %981 = vmatpush1.msra.mxu0 0.0
        %982 = vmatprep.subr.mxu0 0.0
        %983 = vmatpush1.msra.mxu0 0.0
        %984 = vmatprep.subr.mxu0 0.0
        %985 = vmatpush1.msra.mxu0 0.0
        %986 = vmatprep.subr.mxu0 0.0
        %987 = vmatpush1.msra.mxu0 0.0
        %988 = vmatprep.subr.mxu0 0.0
        %989 = vmatpush1.msra.mxu0 0.0
        %990 = vmatprep.subr.mxu0 0.0
        %991 = vmatpush1.msra.mxu0 0.0
        %992 = vmatprep.subr.mxu0 0.0
        %993 = vmatpush1.msra.mxu0 0.0
        %994 = vmatprep.subr.mxu0 0.0
        %995 = vmatpush1.msra.mxu0 0.0
        %996 = vmatprep.subr.mxu0 0.0
        %997 = vmatpush1.msra.mxu0 0.0
        %998 = vmatprep.subr.mxu0 0.0
        %999 = vmatpush1.msra.mxu0 0.0
        %1000 = vmatprep.subr.mxu0 0.0
        %1001 = vmatpush1.msra.mxu0 0.0
        %1002 = vmatprep.subr.mxu0 0.0
        %1003 = vmatpush1.msra.mxu0 0.0
        %1004 = vmatprep.subr.mxu0 0.0
        %1005 = vmatpush1.msra.mxu0 0.0
        %1006 = vmatprep.subr.mxu0 0.0
        %1007 = vmatpush1.msra.mxu0 0.0
        %1008 = vmatprep.subr.mxu0 0.0
        %1009 = vmatpush1.msra.mxu0 0.0
        %1010 = vmatprep.subr.mxu0 0.0
        %1011 = vmatpush1.msra.mxu0 0.0
        %1012 = vmatprep.subr.mxu0 0.0
        %1013 = vmatpush1.msra.mxu0 0.0
        %1014 = vmatprep.subr.mxu0 0.0
        %1015 = vmatpush1.msra.mxu0 0.0
        %1016 = vmatprep.subr.mxu0 0.0
        %1017 = vmatpush1.msra.mxu0 0.0
        %1018 = vmatprep.subr.mxu0 0.0
        %1019 = vmatpush1.msra.mxu0 0.0
        %1020 = vmatprep.subr.mxu0 0.0
        %1021 = vmatpush1.msra.mxu0 0.0
        %1022 = vmatprep.subr.mxu0 0.0
        %1023 = vmatpush1.msra.mxu0 0.0
        %1024 = vmatprep.subr.mxu0 0.0
        %1025 = vmatpush1.msra.mxu0 0.0
        %1026 = vmatprep.subr.mxu0 0.0
        %1027 = vmatpush1.msra.mxu0 0.0
        %1028 = vmatprep.subr.mxu0 0.0
        %1029 = vmatpush1.msra.mxu0 0.0
        %1030 = vmatprep.mubr.f32.mxu0 0.0
        %1031 = vmatmul.mubr.f32.gmra.mrb[0].mxu0 %v958
        %v1032 = vpop.f32.mrb[0].mxu0
        %v1033 = vadd.f32 0.0, %v1032
        %v1034 = vpop.f32.mrb[0].mxu0
        %1035 = vmatprep.mubr.f32.mxu0 0.0
        %1036 = vmatmul.mubr.f32.gmra.mrb[0].mxu0 %v961
        %v1037 = vpop.f32.mrb[0].mxu0
        %v1038 = vadd.f32 0.0, %v1037
        %v1039 = vpop.f32.mrb[0].mxu0
        %1040 = vdwg.mxu0
        %v1042 = vsel %vm871, %v262, 0
        %v1045 = vsel %vm871, %v263, 0
        %v1048 = vsel %vm878, %v755, 0
        %1050 = vmatprep.subr.mxu0 0.0
        %1051 = vmatpush1.msra.mxu0 %v750
        %1052 = vmatprep.subr.mxu0 0.0
        %1053 = vmatpush1.msra.mxu0 %v1048
        %1054 = vmatprep.subr.mxu0 0.0
        %1055 = vmatpush1.msra.mxu0 0.0
        %1056 = vmatprep.subr.mxu0 0.0
        %1057 = vmatpush1.msra.mxu0 0.0
        %1058 = vmatprep.subr.mxu0 0.0
        %1059 = vmatpush1.msra.mxu0 0.0
        %1060 = vmatprep.subr.mxu0 0.0
        %1061 = vmatpush1.msra.mxu0 0.0
        %1062 = vmatprep.subr.mxu0 0.0
        %1063 = vmatpush1.msra.mxu0 0.0
        %1064 = vmatprep.subr.mxu0 0.0
        %1065 = vmatpush1.msra.mxu0 0.0
        %1066 = vmatprep.subr.mxu0 0.0
        %1067 = vmatpush1.msra.mxu0 0.0
        %1068 = vmatprep.subr.mxu0 0.0
        %1069 = vmatpush1.msra.mxu0 0.0
        %1070 = vmatprep.subr.mxu0 0.0
        %1071 = vmatpush1.msra.mxu0 0.0
        %1072 = vmatprep.subr.mxu0 0.0
        %1073 = vmatpush1.msra.mxu0 0.0
        %1074 = vmatprep.subr.mxu0 0.0
        %1075 = vmatpush1.msra.mxu0 0.0
        %1076 = vmatprep.subr.mxu0 0.0
        %1077 = vmatpush1.msra.mxu0 0.0
        %1078 = vmatprep.subr.mxu0 0.0
        %1079 = vmatpush1.msra.mxu0 0.0
        %1080 = vmatprep.subr.mxu0 0.0
        %1081 = vmatpush1.msra.mxu0 0.0
        %1082 = vmatprep.subr.mxu0 0.0
        %1083 = vmatpush1.msra.mxu0 0.0
        %1084 = vmatprep.subr.mxu0 0.0
        %1085 = vmatpush1.msra.mxu0 0.0
        %1086 = vmatprep.subr.mxu0 0.0
        %1087 = vmatpush1.msra.mxu0 0.0
        %1088 = vmatprep.subr.mxu0 0.0
        %1089 = vmatpush1.msra.mxu0 0.0
        %1090 = vmatprep.subr.mxu0 0.0
        %1091 = vmatpush1.msra.mxu0 0.0
        %1092 = vmatprep.subr.mxu0 0.0
        %1093 = vmatpush1.msra.mxu0 0.0
        %1094 = vmatprep.subr.mxu0 0.0
        %1095 = vmatpush1.msra.mxu0 0.0
        %1096 = vmatprep.subr.mxu0 0.0
        %1097 = vmatpush1.msra.mxu0 0.0
        %1098 = vmatprep.subr.mxu0 0.0
        %1099 = vmatpush1.msra.mxu0 0.0
        %1100 = vmatprep.subr.mxu0 0.0
        %1101 = vmatpush1.msra.mxu0 0.0
        %1102 = vmatprep.subr.mxu0 0.0
        %1103 = vmatpush1.msra.mxu0 0.0
        %1104 = vmatprep.subr.mxu0 0.0
        %1105 = vmatpush1.msra.mxu0 0.0
        %1106 = vmatprep.subr.mxu0 0.0
        %1107 = vmatpush1.msra.mxu0 0.0
        %1108 = vmatprep.subr.mxu0 0.0
        %1109 = vmatpush1.msra.mxu0 0.0
        %1110 = vmatprep.subr.mxu0 0.0
        %1111 = vmatpush1.msra.mxu0 0.0
        %1112 = vmatprep.subr.mxu0 0.0
        %1113 = vmatpush1.msra.mxu0 0.0
        %1114 = vmatprep.mubr.f32.mxu0 0.0
        %1115 = vmatmul.mubr.f32.gmra.mrb[0].mxu0 %v1042
        %v1116 = vpop.f32.mrb[0].mxu0
        %v1117 = vadd.f32 0.0, %v1116
        %v1118 = vpop.f32.mrb[0].mxu0
        %1119 = vmatprep.mubr.f32.mxu0 0.0
        %1120 = vmatmul.mubr.f32.gmra.mrb[0].mxu0 %v1045
        %v1121 = vpop.f32.mrb[0].mxu0
        %v1122 = vadd.f32 0.0, %v1121
        %v1123 = vpop.f32.mrb[0].mxu0
        %1124 = vdwg.mxu0
        %v1126 = vsel %vm871, %v264, 0
        %v1129 = vsel %vm871, %v265, 0
        %v1132 = vsel %vm878, %v868, 0
        %1134 = vmatprep.subr.mxu0 0.0
        %1135 = vmatpush1.msra.mxu0 %v863
        %1136 = vmatprep.subr.mxu0 0.0
        %1137 = vmatpush1.msra.mxu0 %v1132
        %1138 = vmatprep.subr.mxu0 0.0
        %1139 = vmatpush1.msra.mxu0 0.0
        %1140 = vmatprep.subr.mxu0 0.0
        %1141 = vmatpush1.msra.mxu0 0.0
        %1142 = vmatprep.subr.mxu0 0.0
        %1143 = vmatpush1.msra.mxu0 0.0
        %1144 = vmatprep.subr.mxu0 0.0
        %1145 = vmatpush1.msra.mxu0 0.0
        %1146 = vmatprep.subr.mxu0 0.0
        %1147 = vmatpush1.msra.mxu0 0.0
        %1148 = vmatprep.subr.mxu0 0.0
        %1149 = vmatpush1.msra.mxu0 0.0
        %1150 = vmatprep.subr.mxu0 0.0
        %1151 = vmatpush1.msra.mxu0 0.0
        %1152 = vmatprep.subr.mxu0 0.0
        %1153 = vmatpush1.msra.mxu0 0.0
        %1154 = vmatprep.subr.mxu0 0.0
        %1155 = vmatpush1.msra.mxu0 0.0
        %1156 = vmatprep.subr.mxu0 0.0
        %1157 = vmatpush1.msra.mxu0 0.0
        %1158 = vmatprep.subr.mxu0 0.0
        %1159 = vmatpush1.msra.mxu0 0.0
        %1160 = vmatprep.subr.mxu0 0.0
        %1161 = vmatpush1.msra.mxu0 0.0
        %1162 = vmatprep.subr.mxu0 0.0
        %1163 = vmatpush1.msra.mxu0 0.0
        %1164 = vmatprep.subr.mxu0 0.0
        %1165 = vmatpush1.msra.mxu0 0.0
        %1166 = vmatprep.subr.mxu0 0.0
        %1167 = vmatpush1.msra.mxu0 0.0
        %1168 = vmatprep.subr.mxu0 0.0
        %1169 = vmatpush1.msra.mxu0 0.0
        %1170 = vmatprep.subr.mxu0 0.0
        %1171 = vmatpush1.msra.mxu0 0.0
        %1172 = vmatprep.subr.mxu0 0.0
        %1173 = vmatpush1.msra.mxu0 0.0
        %1174 = vmatprep.subr.mxu0 0.0
        %1175 = vmatpush1.msra.mxu0 0.0
        %1176 = vmatprep.subr.mxu0 0.0
        %1177 = vmatpush1.msra.mxu0 0.0
        %1178 = vmatprep.subr.mxu0 0.0
        %1179 = vmatpush1.msra.mxu0 0.0
        %1180 = vmatprep.subr.mxu0 0.0
        %1181 = vmatpush1.msra.mxu0 0.0
        %1182 = vmatprep.subr.mxu0 0.0
        %1183 = vmatpush1.msra.mxu0 0.0
        %1184 = vmatprep.subr.mxu0 0.0
        %1185 = vmatpush1.msra.mxu0 0.0
        %1186 = vmatprep.subr.mxu0 0.0
        %1187 = vmatpush1.msra.mxu0 0.0
        %1188 = vmatprep.subr.mxu0 0.0
        %1189 = vmatpush1.msra.mxu0 0.0
        %1190 = vmatprep.subr.mxu0 0.0
        %1191 = vmatpush1.msra.mxu0 0.0
        %1192 = vmatprep.subr.mxu0 0.0
        %1193 = vmatpush1.msra.mxu0 0.0
        %1194 = vmatprep.subr.mxu0 0.0
        %1195 = vmatpush1.msra.mxu0 0.0
        %1196 = vmatprep.subr.mxu0 0.0
        %1197 = vmatpush1.msra.mxu0 0.0
        %1198 = vmatprep.mubr.f32.mxu0 0.0
        %1199 = vmatmul.mubr.f32.gmra.mrb[0].mxu0 %v1126
        %v1200 = vpop.f32.mrb[0].mxu0
        %v1201 = vadd.f32 0.0, %v1200
        %v1202 = vpop.f32.mrb[0].mxu0
        %1203 = vmatprep.mubr.f32.mxu0 0.0
        %1204 = vmatmul.mubr.f32.gmra.mrb[0].mxu0 %v1129
        %v1205 = vpop.f32.mrb[0].mxu0
        %v1206 = vadd.f32 0.0, %v1205
        %v1207 = vpop.f32.mrb[0].mxu0
        %1208 = vdwg.mxu0
        %1210 = vset.pattern.permute.xlu0 0
        %1211 = vperm.xlu0 %1210, %v266
        %v1212 = vpop.permute.xlu0 %1211
        %1215 = vset.pattern.permute.xlu0 0
        %1216 = vperm.xlu0 %1215, %v267
        %v1217 = vpop.permute.xlu0 %1216
        %1220 = vset.pattern.permute.xlu0 0
        %1221 = vperm.xlu0 %1220, %v268
        %v1222 = vpop.permute.xlu0 %1221
        %1225 = vset.pattern.permute.xlu0 0
        %1226 = vperm.xlu0 %1225, %v269
        %v1227 = vpop.permute.xlu0 %1226
        %1230 = vset.pattern.permute.xlu0 0
        %1231 = vperm.xlu0 %1230, %v270
        %v1232 = vpop.permute.xlu0 %1231
        %1235 = vset.pattern.permute.xlu0 0
        %1236 = vperm.xlu0 %1235, %v271
        %v1237 = vpop.permute.xlu0 %1236
        %1240 = vset.pattern.permute.xlu0 0
        %1241 = vperm.xlu0 %1240, %v272
        %v1242 = vpop.permute.xlu0 %1241
        %1245 = vset.pattern.permute.xlu0 0
        %1246 = vperm.xlu0 %1245, %v273
        %v1247 = vpop.permute.xlu0 %1246
        %v1249 = vmul.f32 %v949, %v1212
        %v1250 = vmul.f32 %v954, %v1217
        %v1251 = vmul.f32 %v1033, %v1222
        %v1252 = vmul.f32 %v1038, %v1227
        %v1253 = vmul.f32 %v1117, %v1232
        %v1254 = vmul.f32 %v1122, %v1237
        %v1255 = vmul.f32 %v1201, %v1242
        %v1256 = vmul.f32 %v1206, %v1247
        %v1257 = vadd.f32 %v380, %v1249
        %v1258 = vadd.f32 %v385, %v1250
        %v1259 = vadd.f32 %v390, %v1251
        %v1260 = vadd.f32 %v395, %v1252
        %v1261 = vadd.f32 %v400, %v1253
        %v1262 = vadd.f32 %v405, %v1254
        %v1263 = vadd.f32 %v410, %v1255
        %v1264 = vadd.f32 %v415, %v1256
        %v1265 = vlaneseq
        %v1266 = vshrl.u32 %v1265, 7
        %v1267 = vsub.s32 0, %v1266
        %v1268 = vrot.slane %v280, %v1267
        %vm1269 = vcmask 261120
        %v1271 = vsel %vm1269, %v1257, 0
        %v1274 = vsel %vm1269, %v1258, 0
        %v1277 = vsel %vm1269, %v1259, 0
        %v1280 = vsel %vm1269, %v1260, 0
        %v1283 = vsel %vm1269, %v1261, 0
        %v1286 = vsel %vm1269, %v1262, 0
        %v1289 = vsel %vm1269, %v1263, 0
        %v1292 = vsel %vm1269, %v1264, 0
        %1294 = vmatprep.subr.mxu0 0.0
        %1295 = vmatpush1.msra.mxu0 %v275
        %1296 = vmatprep.subr.mxu0 0.0
        %1297 = vmatpush1.msra.mxu0 %v276
        %1298 = vmatprep.subr.mxu0 0.0
        %1299 = vmatpush1.msra.mxu0 %v277
        %1300 = vmatprep.subr.mxu0 0.0
        %1301 = vmatpush1.msra.mxu0 %v278
        %1302 = vmatprep.subr.mxu0 0.0
        %1303 = vmatpush1.msra.mxu0 0.0
        %1304 = vmatprep.subr.mxu0 0.0
        %1305 = vmatpush1.msra.mxu0 0.0
        %1306 = vmatprep.subr.mxu0 0.0
        %1307 = vmatpush1.msra.mxu0 0.0
        %1308 = vmatprep.subr.mxu0 0.0
        %1309 = vmatpush1.msra.mxu0 0.0
        %1310 = vmatprep.subr.mxu0 0.0
        %1311 = vmatpush1.msra.mxu0 0.0
        %1312 = vmatprep.subr.mxu0 0.0
        %1313 = vmatpush1.msra.mxu0 0.0
        %1314 = vmatprep.subr.mxu0 0.0
        %1315 = vmatpush1.msra.mxu0 0.0
        %1316 = vmatprep.subr.mxu0 0.0
        %1317 = vmatpush1.msra.mxu0 0.0
        %1318 = vmatprep.subr.mxu0 0.0
        %1319 = vmatpush1.msra.mxu0 0.0
        %1320 = vmatprep.subr.mxu0 0.0
        %1321 = vmatpush1.msra.mxu0 0.0
        %1322 = vmatprep.subr.mxu0 0.0
        %1323 = vmatpush1.msra.mxu0 0.0
        %1324 = vmatprep.subr.mxu0 0.0
        %1325 = vmatpush1.msra.mxu0 0.0
        %1326 = vmatprep.subr.mxu0 0.0
        %1327 = vmatpush1.msra.mxu0 0.0
        %1328 = vmatprep.subr.mxu0 0.0
        %1329 = vmatpush1.msra.mxu0 0.0
        %1330 = vmatprep.subr.mxu0 0.0
        %1331 = vmatpush1.msra.mxu0 0.0
        %1332 = vmatprep.subr.mxu0 0.0
        %1333 = vmatpush1.msra.mxu0 0.0
        %1334 = vmatprep.subr.mxu0 0.0
        %1335 = vmatpush1.msra.mxu0 0.0
        %1336 = vmatprep.subr.mxu0 0.0
        %1337 = vmatpush1.msra.mxu0 0.0
        %1338 = vmatprep.subr.mxu0 0.0
        %1339 = vmatpush1.msra.mxu0 0.0
        %1340 = vmatprep.subr.mxu0 0.0
        %1341 = vmatpush1.msra.mxu0 0.0
        %1342 = vmatprep.subr.mxu0 0.0
        %1343 = vmatpush1.msra.mxu0 0.0
        %1344 = vmatprep.subr.mxu0 0.0
        %1345 = vmatpush1.msra.mxu0 0.0
        %1346 = vmatprep.subr.mxu0 0.0
        %1347 = vmatpush1.msra.mxu0 0.0
        %1348 = vmatprep.subr.mxu0 0.0
        %1349 = vmatpush1.msra.mxu0 0.0
        %1350 = vmatprep.subr.mxu0 0.0
        %1351 = vmatpush1.msra.mxu0 0.0
        %1352 = vmatprep.subr.mxu0 0.0
        %1353 = vmatpush1.msra.mxu0 0.0
        %1354 = vmatprep.subr.mxu0 0.0
        %1355 = vmatpush1.msra.mxu0 0.0
        %1356 = vmatprep.subr.mxu0 0.0
        %1357 = vmatpush1.msra.mxu0 0.0
        %1358 = vmatprep.mubr.f32.mxu0 0.0
        %1359 = vmatmul.mubr.f32.gmra.mrb[0].mxu0 %v1271
        %v1360 = vpop.f32.mrb[0].mxu0
        %v1361 = vadd.f32 %v1268, %v1360
        %v1362 = vpop.f32.mrb[0].mxu0
        %1363 = vmatprep.mubr.f32.mxu0 0.0
        %1364 = vmatmul.mubr.f32.gmra.mrb[0].mxu0 %v1274
        %v1365 = vpop.f32.mrb[0].mxu0
        %v1366 = vadd.f32 %v1268, %v1365
        %v1367 = vpop.f32.mrb[0].mxu0
        %1368 = vmatprep.mubr.f32.mxu0 0.0
        %1369 = vmatmul.mubr.f32.gmra.mrb[0].mxu0 %v1277
        %v1370 = vpop.f32.mrb[0].mxu0
        %v1371 = vadd.f32 %v1268, %v1370
        %v1372 = vpop.f32.mrb[0].mxu0
        %1373 = vmatprep.mubr.f32.mxu0 0.0
        %1374 = vmatmul.mubr.f32.gmra.mrb[0].mxu0 %v1280
        %v1375 = vpop.f32.mrb[0].mxu0
        %v1376 = vadd.f32 %v1268, %v1375
        %v1377 = vpop.f32.mrb[0].mxu0
        %1378 = vmatprep.mubr.f32.mxu0 0.0
        %1379 = vmatmul.mubr.f32.gmra.mrb[0].mxu0 %v1283
        %v1380 = vpop.f32.mrb[0].mxu0
        %v1381 = vadd.f32 %v1268, %v1380
        %v1382 = vpop.f32.mrb[0].mxu0
        %1383 = vmatprep.mubr.f32.mxu0 0.0
        %1384 = vmatmul.mubr.f32.gmra.mrb[0].mxu0 %v1286
        %v1385 = vpop.f32.mrb[0].mxu0
        %v1386 = vadd.f32 %v1268, %v1385
        %v1387 = vpop.f32.mrb[0].mxu0
        %1388 = vmatprep.mubr.f32.mxu0 0.0
        %1389 = vmatmul.mubr.f32.gmra.mrb[0].mxu0 %v1289
        %v1390 = vpop.f32.mrb[0].mxu0
        %v1391 = vadd.f32 %v1268, %v1390
        %v1392 = vpop.f32.mrb[0].mxu0
        %1393 = vmatprep.mubr.f32.mxu0 0.0
        %1394 = vmatmul.mubr.f32.gmra.mrb[0].mxu0 %v1292
        %v1395 = vpop.f32.mrb[0].mxu0
        %v1396 = vadd.f32 %v1268, %v1395
        %v1397 = vpop.f32.mrb[0].mxu0
        %1398 = vdwg.mxu0
        %1399 = vmatprep.subr.mxu0 0.0
        %1400 = vmatpush1.msra.mxu0 %v1361
        %1401 = vmatprep.subr.mxu0 0.0
        %1402 = vmatpush1.msra.mxu0 %v1366
        %1403 = vmatprep.subr.mxu0 0.0
        %1404 = vmatpush1.msra.mxu0 0.0
        %1405 = vmatprep.subr.mxu0 0.0
        %1406 = vmatpush1.msra.mxu0 0.0
        %1407 = vmatprep.subr.mxu0 0.0
        %1408 = vmatpush1.msra.mxu0 0.0
        %1409 = vmatprep.subr.mxu0 0.0
        %1410 = vmatpush1.msra.mxu0 0.0
        %1411 = vmatprep.subr.mxu0 0.0
        %1412 = vmatpush1.msra.mxu0 0.0
        %1413 = vmatprep.subr.mxu0 0.0
        %1414 = vmatpush1.msra.mxu0 0.0
        %1415 = vmatprep.subr.mxu0 0.0
        %1416 = vmatpush1.msra.mxu0 0.0
        %1417 = vmatprep.subr.mxu0 0.0
        %1418 = vmatpush1.msra.mxu0 0.0
        %1419 = vmatprep.subr.mxu0 0.0
        %1420 = vmatpush1.msra.mxu0 0.0
        %1421 = vmatprep.subr.mxu0 0.0
        %1422 = vmatpush1.msra.mxu0 0.0
        %1423 = vmatprep.subr.mxu0 0.0
        %1424 = vmatpush1.msra.mxu0 0.0
        %1425 = vmatprep.subr.mxu0 0.0
        %1426 = vmatpush1.msra.mxu0 0.0
        %1427 = vmatprep.subr.mxu0 0.0
        %1428 = vmatpush1.msra.mxu0 0.0
        %1429 = vmatprep.subr.mxu0 0.0
        %1430 = vmatpush1.msra.mxu0 0.0
        %1431 = vmatprep.subr.mxu0 0.0
        %1432 = vmatpush1.msra.mxu0 0.0
        %1433 = vmatprep.subr.mxu0 0.0
        %1434 = vmatpush1.msra.mxu0 0.0
        %1435 = vmatprep.subr.mxu0 0.0
        %1436 = vmatpush1.msra.mxu0 0.0
        %1437 = vmatprep.subr.mxu0 0.0
        %1438 = vmatpush1.msra.mxu0 0.0
        %1439 = vmatprep.subr.mxu0 0.0
        %1440 = vmatpush1.msra.mxu0 0.0
        %1441 = vmatprep.subr.mxu0 0.0
        %1442 = vmatpush1.msra.mxu0 0.0
        %1443 = vmatprep.subr.mxu0 0.0
        %1444 = vmatpush1.msra.mxu0 0.0
        %1445 = vmatprep.subr.mxu0 0.0
        %1446 = vmatpush1.msra.mxu0 0.0
        %1447 = vmatprep.subr.mxu0 0.0
        %1448 = vmatpush1.msra.mxu0 0.0
        %1449 = vmatprep.subr.mxu0 0.0
        %1450 = vmatpush1.msra.mxu0 0.0
        %1451 = vmatprep.subr.mxu0 0.0
        %1452 = vmatpush1.msra.mxu0 0.0
        %1453 = vmatprep.subr.mxu0 0.0
        %1454 = vmatpush1.msra.mxu0 0.0
        %1455 = vmatprep.subr.mxu0 0.0
        %1456 = vmatpush1.msra.mxu0 0.0
        %1457 = vmatprep.subr.mxu0 0.0
        %1458 = vmatpush1.msra.mxu0 0.0
        %1459 = vmatprep.subr.mxu0 0.0
        %1460 = vmatpush1.msra.mxu0 0.0
        %1461 = vmatprep.subr.mxu0 0.0
        %1462 = vmatpush1.msra.mxu0 0.0
        %1463 = vmatprep.mubr.f32.mxu0 0.0
        %1464 = vmatmul.mubr.f32.gmra.mrb[0].mxu0 %v452
        %v1465 = vpop.f32.mrb[0].mxu0
        %v1466 = vadd.f32 0.0, %v1465
        %v1467 = vpop.f32.mrb[0].mxu0
        %1468 = vmatprep.mubr.f32.mxu0 0.0
        %1469 = vmatmul.mubr.f32.gmra.mrb[0].mxu0 %v455
        %v1470 = vpop.f32.mrb[0].mxu0
        %v1471 = vadd.f32 0.0, %v1470
        %v1472 = vpop.f32.mrb[0].mxu0
        %1473 = vdwg.mxu0
        %1474 = vmatprep.subr.mxu0 0.0
        %1475 = vmatpush1.msra.mxu0 %v1371
        %1476 = vmatprep.subr.mxu0 0.0
        %1477 = vmatpush1.msra.mxu0 %v1376
        %1478 = vmatprep.subr.mxu0 0.0
        %1479 = vmatpush1.msra.mxu0 0.0
        %1480 = vmatprep.subr.mxu0 0.0
        %1481 = vmatpush1.msra.mxu0 0.0
        %1482 = vmatprep.subr.mxu0 0.0
        %1483 = vmatpush1.msra.mxu0 0.0
        %1484 = vmatprep.subr.mxu0 0.0
        %1485 = vmatpush1.msra.mxu0 0.0
        %1486 = vmatprep.subr.mxu0 0.0
        %1487 = vmatpush1.msra.mxu0 0.0
        %1488 = vmatprep.subr.mxu0 0.0
        %1489 = vmatpush1.msra.mxu0 0.0
        %1490 = vmatprep.subr.mxu0 0.0
        %1491 = vmatpush1.msra.mxu0 0.0
        %1492 = vmatprep.subr.mxu0 0.0
        %1493 = vmatpush1.msra.mxu0 0.0
        %1494 = vmatprep.subr.mxu0 0.0
        %1495 = vmatpush1.msra.mxu0 0.0
        %1496 = vmatprep.subr.mxu0 0.0
        %1497 = vmatpush1.msra.mxu0 0.0
        %1498 = vmatprep.subr.mxu0 0.0
        %1499 = vmatpush1.msra.mxu0 0.0
        %1500 = vmatprep.subr.mxu0 0.0
        %1501 = vmatpush1.msra.mxu0 0.0
        %1502 = vmatprep.subr.mxu0 0.0
        %1503 = vmatpush1.msra.mxu0 0.0
        %1504 = vmatprep.subr.mxu0 0.0
        %1505 = vmatpush1.msra.mxu0 0.0
        %1506 = vmatprep.subr.mxu0 0.0
        %1507 = vmatpush1.msra.mxu0 0.0
        %1508 = vmatprep.subr.mxu0 0.0
        %1509 = vmatpush1.msra.mxu0 0.0
        %1510 = vmatprep.subr.mxu0 0.0
        %1511 = vmatpush1.msra.mxu0 0.0
        %1512 = vmatprep.subr.mxu0 0.0
        %1513 = vmatpush1.msra.mxu0 0.0
        %1514 = vmatprep.subr.mxu0 0.0
        %1515 = vmatpush1.msra.mxu0 0.0
        %1516 = vmatprep.subr.mxu0 0.0
        %1517 = vmatpush1.msra.mxu0 0.0
        %1518 = vmatprep.subr.mxu0 0.0
        %1519 = vmatpush1.msra.mxu0 0.0
        %1520 = vmatprep.subr.mxu0 0.0
        %1521 = vmatpush1.msra.mxu0 0.0
        %1522 = vmatprep.subr.mxu0 0.0
        %1523 = vmatpush1.msra.mxu0 0.0
        %1524 = vmatprep.subr.mxu0 0.0
        %1525 = vmatpush1.msra.mxu0 0.0
        %1526 = vmatprep.subr.mxu0 0.0
        %1527 = vmatpush1.msra.mxu0 0.0
        %1528 = vmatprep.subr.mxu0 0.0
        %1529 = vmatpush1.msra.mxu0 0.0
        %1530 = vmatprep.subr.mxu0 0.0
        %1531 = vmatpush1.msra.mxu0 0.0
        %1532 = vmatprep.subr.mxu0 0.0
        %1533 = vmatpush1.msra.mxu0 0.0
        %1534 = vmatprep.subr.mxu0 0.0
        %1535 = vmatpush1.msra.mxu0 0.0
        %1536 = vmatprep.subr.mxu0 0.0
        %1537 = vmatpush1.msra.mxu0 0.0
        %1538 = vmatprep.mubr.f32.mxu0 0.0
        %1539 = vmatmul.mubr.f32.gmra.mrb[0].mxu0 %v565
        %v1540 = vpop.f32.mrb[0].mxu0
        %v1541 = vadd.f32 0.0, %v1540
        %v1542 = vpop.f32.mrb[0].mxu0
        %1543 = vmatprep.mubr.f32.mxu0 0.0
        %1544 = vmatmul.mubr.f32.gmra.mrb[0].mxu0 %v568
        %v1545 = vpop.f32.mrb[0].mxu0
        %v1546 = vadd.f32 0.0, %v1545
        %v1547 = vpop.f32.mrb[0].mxu0
        %1548 = vdwg.mxu0
        %1549 = vmatprep.subr.mxu0 0.0
        %1550 = vmatpush1.msra.mxu0 %v1381
        %1551 = vmatprep.subr.mxu0 0.0
        %1552 = vmatpush1.msra.mxu0 %v1386
        %1553 = vmatprep.subr.mxu0 0.0
        %1554 = vmatpush1.msra.mxu0 0.0
        %1555 = vmatprep.subr.mxu0 0.0
        %1556 = vmatpush1.msra.mxu0 0.0
        %1557 = vmatprep.subr.mxu0 0.0
        %1558 = vmatpush1.msra.mxu0 0.0
        %1559 = vmatprep.subr.mxu0 0.0
        %1560 = vmatpush1.msra.mxu0 0.0
        %1561 = vmatprep.subr.mxu0 0.0
        %1562 = vmatpush1.msra.mxu0 0.0
        %1563 = vmatprep.subr.mxu0 0.0
        %1564 = vmatpush1.msra.mxu0 0.0
        %1565 = vmatprep.subr.mxu0 0.0
        %1566 = vmatpush1.msra.mxu0 0.0
        %1567 = vmatprep.subr.mxu0 0.0
        %1568 = vmatpush1.msra.mxu0 0.0
        %1569 = vmatprep.subr.mxu0 0.0
        %1570 = vmatpush1.msra.mxu0 0.0
        %1571 = vmatprep.subr.mxu0 0.0
        %1572 = vmatpush1.msra.mxu0 0.0
        %1573 = vmatprep.subr.mxu0 0.0
        %1574 = vmatpush1.msra.mxu0 0.0
        %1575 = vmatprep.subr.mxu0 0.0
        %1576 = vmatpush1.msra.mxu0 0.0
        %1577 = vmatprep.subr.mxu0 0.0
        %1578 = vmatpush1.msra.mxu0 0.0
        %1579 = vmatprep.subr.mxu0 0.0
        %1580 = vmatpush1.msra.mxu0 0.0
        %1581 = vmatprep.subr.mxu0 0.0
        %1582 = vmatpush1.msra.mxu0 0.0
        %1583 = vmatprep.subr.mxu0 0.0
        %1584 = vmatpush1.msra.mxu0 0.0
        %1585 = vmatprep.subr.mxu0 0.0
        %1586 = vmatpush1.msra.mxu0 0.0
        %1587 = vmatprep.subr.mxu0 0.0
        %1588 = vmatpush1.msra.mxu0 0.0
        %1589 = vmatprep.subr.mxu0 0.0
        %1590 = vmatpush1.msra.mxu0 0.0
        %1591 = vmatprep.subr.mxu0 0.0
        %1592 = vmatpush1.msra.mxu0 0.0
        %1593 = vmatprep.subr.mxu0 0.0
        %1594 = vmatpush1.msra.mxu0 0.0
        %1595 = vmatprep.subr.mxu0 0.0
        %1596 = vmatpush1.msra.mxu0 0.0
        %1597 = vmatprep.subr.mxu0 0.0
        %1598 = vmatpush1.msra.mxu0 0.0
        %1599 = vmatprep.subr.mxu0 0.0
        %1600 = vmatpush1.msra.mxu0 0.0
        %1601 = vmatprep.subr.mxu0 0.0
        %1602 = vmatpush1.msra.mxu0 0.0
        %1603 = vmatprep.subr.mxu0 0.0
        %1604 = vmatpush1.msra.mxu0 0.0
        %1605 = vmatprep.subr.mxu0 0.0
        %1606 = vmatpush1.msra.mxu0 0.0
        %1607 = vmatprep.subr.mxu0 0.0
        %1608 = vmatpush1.msra.mxu0 0.0
        %1609 = vmatprep.subr.mxu0 0.0
        %1610 = vmatpush1.msra.mxu0 0.0
        %1611 = vmatprep.subr.mxu0 0.0
        %1612 = vmatpush1.msra.mxu0 0.0
        %1613 = vmatprep.mubr.f32.mxu0 0.0
        %1614 = vmatmul.mubr.f32.gmra.mrb[0].mxu0 %v678
        %v1615 = vpop.f32.mrb[0].mxu0
        %v1616 = vadd.f32 0.0, %v1615
        %v1617 = vpop.f32.mrb[0].mxu0
        %1618 = vmatprep.mubr.f32.mxu0 0.0
        %1619 = vmatmul.mubr.f32.gmra.mrb[0].mxu0 %v681
        %v1620 = vpop.f32.mrb[0].mxu0
        %v1621 = vadd.f32 0.0, %v1620
        %v1622 = vpop.f32.mrb[0].mxu0
        %1623 = vdwg.mxu0
        %1624 = vmatprep.subr.mxu0 0.0
        %1625 = vmatpush1.msra.mxu0 %v1391
        %1626 = vmatprep.subr.mxu0 0.0
        %1627 = vmatpush1.msra.mxu0 %v1396
        %1628 = vmatprep.subr.mxu0 0.0
        %1629 = vmatpush1.msra.mxu0 0.0
        %1630 = vmatprep.subr.mxu0 0.0
        %1631 = vmatpush1.msra.mxu0 0.0
        %1632 = vmatprep.subr.mxu0 0.0
        %1633 = vmatpush1.msra.mxu0 0.0
        %1634 = vmatprep.subr.mxu0 0.0
        %1635 = vmatpush1.msra.mxu0 0.0
        %1636 = vmatprep.subr.mxu0 0.0
        %1637 = vmatpush1.msra.mxu0 0.0
        %1638 = vmatprep.subr.mxu0 0.0
        %1639 = vmatpush1.msra.mxu0 0.0
        %1640 = vmatprep.subr.mxu0 0.0
        %1641 = vmatpush1.msra.mxu0 0.0
        %1642 = vmatprep.subr.mxu0 0.0
        %1643 = vmatpush1.msra.mxu0 0.0
        %1644 = vmatprep.subr.mxu0 0.0
        %1645 = vmatpush1.msra.mxu0 0.0
        %1646 = vmatprep.subr.mxu0 0.0
        %1647 = vmatpush1.msra.mxu0 0.0
        %1648 = vmatprep.subr.mxu0 0.0
        %1649 = vmatpush1.msra.mxu0 0.0
        %1650 = vmatprep.subr.mxu0 0.0
        %1651 = vmatpush1.msra.mxu0 0.0
        %1652 = vmatprep.subr.mxu0 0.0
        %1653 = vmatpush1.msra.mxu0 0.0
        %1654 = vmatprep.subr.mxu0 0.0
        %1655 = vmatpush1.msra.mxu0 0.0
        %1656 = vmatprep.subr.mxu0 0.0
        %1657 = vmatpush1.msra.mxu0 0.0
        %1658 = vmatprep.subr.mxu0 0.0
        %1659 = vmatpush1.msra.mxu0 0.0
        %1660 = vmatprep.subr.mxu0 0.0
        %1661 = vmatpush1.msra.mxu0 0.0
        %1662 = vmatprep.subr.mxu0 0.0
        %1663 = vmatpush1.msra.mxu0 0.0
        %1664 = vmatprep.subr.mxu0 0.0
        %1665 = vmatpush1.msra.mxu0 0.0
        %1666 = vmatprep.subr.mxu0 0.0
        %1667 = vmatpush1.msra.mxu0 0.0
        %1668 = vmatprep.subr.mxu0 0.0
        %1669 = vmatpush1.msra.mxu0 0.0
        %1670 = vmatprep.subr.mxu0 0.0
        %1671 = vmatpush1.msra.mxu0 0.0
        %1672 = vmatprep.subr.mxu0 0.0
        %1673 = vmatpush1.msra.mxu0 0.0
        %1674 = vmatprep.subr.mxu0 0.0
        %1675 = vmatpush1.msra.mxu0 0.0
        %1676 = vmatprep.subr.mxu0 0.0
        %1677 = vmatpush1.msra.mxu0 0.0
        %1678 = vmatprep.subr.mxu0 0.0
        %1679 = vmatpush1.msra.mxu0 0.0
        %1680 = vmatprep.subr.mxu0 0.0
        %1681 = vmatpush1.msra.mxu0 0.0
        %1682 = vmatprep.subr.mxu0 0.0
        %1683 = vmatpush1.msra.mxu0 0.0
        %1684 = vmatprep.subr.mxu0 0.0
        %1685 = vmatpush1.msra.mxu0 0.0
        %1686 = vmatprep.subr.mxu0 0.0
        %1687 = vmatpush1.msra.mxu0 0.0
        %1688 = vmatprep.mubr.f32.mxu0 0.0
        %1689 = vmatmul.mubr.f32.gmra.mrb[0].mxu0 %v791
        %v1690 = vpop.f32.mrb[0].mxu0
        %v1691 = vadd.f32 0.0, %v1690
        %v1692 = vpop.f32.mrb[0].mxu0
        %1693 = vmatprep.mubr.f32.mxu0 0.0
        %1694 = vmatmul.mubr.f32.gmra.mrb[0].mxu0 %v794
        %v1695 = vpop.f32.mrb[0].mxu0
        %v1696 = vadd.f32 0.0, %v1695
        %v1697 = vpop.f32.mrb[0].mxu0
        %1698 = vdwg.mxu0
        %v1700 = vsel %vm878, %v1471, 0
        %1702 = vmatprep.subr.mxu0 0.0
        %1703 = vmatpush1.msra.mxu0 %v1466
        %1704 = vmatprep.subr.mxu0 0.0
        %1705 = vmatpush1.msra.mxu0 %v1700
        %1706 = vmatprep.subr.mxu0 0.0
        %1707 = vmatpush1.msra.mxu0 0.0
        %1708 = vmatprep.subr.mxu0 0.0
        %1709 = vmatpush1.msra.mxu0 0.0
        %1710 = vmatprep.subr.mxu0 0.0
        %1711 = vmatpush1.msra.mxu0 0.0
        %1712 = vmatprep.subr.mxu0 0.0
        %1713 = vmatpush1.msra.mxu0 0.0
        %1714 = vmatprep.subr.mxu0 0.0
        %1715 = vmatpush1.msra.mxu0 0.0
        %1716 = vmatprep.subr.mxu0 0.0
        %1717 = vmatpush1.msra.mxu0 0.0
        %1718 = vmatprep.subr.mxu0 0.0
        %1719 = vmatpush1.msra.mxu0 0.0
        %1720 = vmatprep.subr.mxu0 0.0
        %1721 = vmatpush1.msra.mxu0 0.0
        %1722 = vmatprep.subr.mxu0 0.0
        %1723 = vmatpush1.msra.mxu0 0.0
        %1724 = vmatprep.subr.mxu0 0.0
        %1725 = vmatpush1.msra.mxu0 0.0
        %1726 = vmatprep.subr.mxu0 0.0
        %1727 = vmatpush1.msra.mxu0 0.0
        %1728 = vmatprep.subr.mxu0 0.0
        %1729 = vmatpush1.msra.mxu0 0.0
        %1730 = vmatprep.subr.mxu0 0.0
        %1731 = vmatpush1.msra.mxu0 0.0
        %1732 = vmatprep.subr.mxu0 0.0
        %1733 = vmatpush1.msra.mxu0 0.0
        %1734 = vmatprep.subr.mxu0 0.0
        %1735 = vmatpush1.msra.mxu0 0.0
        %1736 = vmatprep.subr.mxu0 0.0
        %1737 = vmatpush1.msra.mxu0 0.0
        %1738 = vmatprep.subr.mxu0 0.0
        %1739 = vmatpush1.msra.mxu0 0.0
        %1740 = vmatprep.subr.mxu0 0.0
        %1741 = vmatpush1.msra.mxu0 0.0
        %1742 = vmatprep.subr.mxu0 0.0
        %1743 = vmatpush1.msra.mxu0 0.0
        %1744 = vmatprep.subr.mxu0 0.0
        %1745 = vmatpush1.msra.mxu0 0.0
        %1746 = vmatprep.subr.mxu0 0.0
        %1747 = vmatpush1.msra.mxu0 0.0
        %1748 = vmatprep.subr.mxu0 0.0
        %1749 = vmatpush1.msra.mxu0 0.0
        %1750 = vmatprep.subr.mxu0 0.0
        %1751 = vmatpush1.msra.mxu0 0.0
        %1752 = vmatprep.subr.mxu0 0.0
        %1753 = vmatpush1.msra.mxu0 0.0
        %1754 = vmatprep.subr.mxu0 0.0
        %1755 = vmatpush1.msra.mxu0 0.0
        %1756 = vmatprep.subr.mxu0 0.0
        %1757 = vmatpush1.msra.mxu0 0.0
        %1758 = vmatprep.subr.mxu0 0.0
        %1759 = vmatpush1.msra.mxu0 0.0
        %1760 = vmatprep.subr.mxu0 0.0
        %1761 = vmatpush1.msra.mxu0 0.0
        %1762 = vmatprep.subr.mxu0 0.0
        %1763 = vmatpush1.msra.mxu0 0.0
        %1764 = vmatprep.subr.mxu0 0.0
        %1765 = vmatpush1.msra.mxu0 0.0
        %1766 = vmatprep.mubr.f32.mxu0 0.0
        %1767 = vmatmul.mubr.f32.gmra.mrb[0].mxu0 %v873
        %v1768 = vpop.f32.mrb[0].mxu0
        %v1769 = vadd.f32 0.0, %v1768
        %v1770 = vpop.f32.mrb[0].mxu0
        %1771 = vmatprep.mubr.f32.mxu0 0.0
        %1772 = vmatmul.mubr.f32.gmra.mrb[0].mxu0 %v876
        %v1773 = vpop.f32.mrb[0].mxu0
        %v1774 = vadd.f32 0.0, %v1773
        %v1775 = vpop.f32.mrb[0].mxu0
        %1776 = vdwg.mxu0
        %v1778 = vsel %vm878, %v1546, 0
        %1780 = vmatprep.subr.mxu0 0.0
        %1781 = vmatpush1.msra.mxu0 %v1541
        %1782 = vmatprep.subr.mxu0 0.0
        %1783 = vmatpush1.msra.mxu0 %v1778
        %1784 = vmatprep.subr.mxu0 0.0
        %1785 = vmatpush1.msra.mxu0 0.0
        %1786 = vmatprep.subr.mxu0 0.0
        %1787 = vmatpush1.msra.mxu0 0.0
        %1788 = vmatprep.subr.mxu0 0.0
        %1789 = vmatpush1.msra.mxu0 0.0
        %1790 = vmatprep.subr.mxu0 0.0
        %1791 = vmatpush1.msra.mxu0 0.0
        %1792 = vmatprep.subr.mxu0 0.0
        %1793 = vmatpush1.msra.mxu0 0.0
        %1794 = vmatprep.subr.mxu0 0.0
        %1795 = vmatpush1.msra.mxu0 0.0
        %1796 = vmatprep.subr.mxu0 0.0
        %1797 = vmatpush1.msra.mxu0 0.0
        %1798 = vmatprep.subr.mxu0 0.0
        %1799 = vmatpush1.msra.mxu0 0.0
        %1800 = vmatprep.subr.mxu0 0.0
        %1801 = vmatpush1.msra.mxu0 0.0
        %1802 = vmatprep.subr.mxu0 0.0
        %1803 = vmatpush1.msra.mxu0 0.0
        %1804 = vmatprep.subr.mxu0 0.0
        %1805 = vmatpush1.msra.mxu0 0.0
        %1806 = vmatprep.subr.mxu0 0.0
        %1807 = vmatpush1.msra.mxu0 0.0
        %1808 = vmatprep.subr.mxu0 0.0
        %1809 = vmatpush1.msra.mxu0 0.0
        %1810 = vmatprep.subr.mxu0 0.0
        %1811 = vmatpush1.msra.mxu0 0.0
        %1812 = vmatprep.subr.mxu0 0.0
        %1813 = vmatpush1.msra.mxu0 0.0
        %1814 = vmatprep.subr.mxu0 0.0
        %1815 = vmatpush1.msra.mxu0 0.0
        %1816 = vmatprep.subr.mxu0 0.0
        %1817 = vmatpush1.msra.mxu0 0.0
        %1818 = vmatprep.subr.mxu0 0.0
        %1819 = vmatpush1.msra.mxu0 0.0
        %1820 = vmatprep.subr.mxu0 0.0
        %1821 = vmatpush1.msra.mxu0 0.0
        %1822 = vmatprep.subr.mxu0 0.0
        %1823 = vmatpush1.msra.mxu0 0.0
        %1824 = vmatprep.subr.mxu0 0.0
        %1825 = vmatpush1.msra.mxu0 0.0
        %1826 = vmatprep.subr.mxu0 0.0
        %1827 = vmatpush1.msra.mxu0 0.0
        %1828 = vmatprep.subr.mxu0 0.0
        %1829 = vmatpush1.msra.mxu0 0.0
        %1830 = vmatprep.subr.mxu0 0.0
        %1831 = vmatpush1.msra.mxu0 0.0
        %1832 = vmatprep.subr.mxu0 0.0
        %1833 = vmatpush1.msra.mxu0 0.0
        %1834 = vmatprep.subr.mxu0 0.0
        %1835 = vmatpush1.msra.mxu0 0.0
        %1836 = vmatprep.subr.mxu0 0.0
        %1837 = vmatpush1.msra.mxu0 0.0
        %1838 = vmatprep.subr.mxu0 0.0
        %1839 = vmatpush1.msra.mxu0 0.0
        %1840 = vmatprep.subr.mxu0 0.0
        %1841 = vmatpush1.msra.mxu0 0.0
        %1842 = vmatprep.subr.mxu0 0.0
        %1843 = vmatpush1.msra.mxu0 0.0
        %1844 = vmatprep.mubr.f32.mxu0 0.0
        %1845 = vmatmul.mubr.f32.gmra.mrb[0].mxu0 %v958
        %v1846 = vpop.f32.mrb[0].mxu0
        %v1847 = vadd.f32 0.0, %v1846
        %v1848 = vpop.f32.mrb[0].mxu0
        %1849 = vmatprep.mubr.f32.mxu0 0.0
        %1850 = vmatmul.mubr.f32.gmra.mrb[0].mxu0 %v961
        %v1851 = vpop.f32.mrb[0].mxu0
        %v1852 = vadd.f32 0.0, %v1851
        %v1853 = vpop.f32.mrb[0].mxu0
        %1854 = vdwg.mxu0
        %v1856 = vsel %vm878, %v1621, 0
        %1858 = vmatprep.subr.mxu0 0.0
        %1859 = vmatpush1.msra.mxu0 %v1616
        %1860 = vmatprep.subr.mxu0 0.0
        %1861 = vmatpush1.msra.mxu0 %v1856
        %1862 = vmatprep.subr.mxu0 0.0
        %1863 = vmatpush1.msra.mxu0 0.0
        %1864 = vmatprep.subr.mxu0 0.0
        %1865 = vmatpush1.msra.mxu0 0.0
        %1866 = vmatprep.subr.mxu0 0.0
        %1867 = vmatpush1.msra.mxu0 0.0
        %1868 = vmatprep.subr.mxu0 0.0
        %1869 = vmatpush1.msra.mxu0 0.0
        %1870 = vmatprep.subr.mxu0 0.0
        %1871 = vmatpush1.msra.mxu0 0.0
        %1872 = vmatprep.subr.mxu0 0.0
        %1873 = vmatpush1.msra.mxu0 0.0
        %1874 = vmatprep.subr.mxu0 0.0
        %1875 = vmatpush1.msra.mxu0 0.0
        %1876 = vmatprep.subr.mxu0 0.0
        %1877 = vmatpush1.msra.mxu0 0.0
        %1878 = vmatprep.subr.mxu0 0.0
        %1879 = vmatpush1.msra.mxu0 0.0
        %1880 = vmatprep.subr.mxu0 0.0
        %1881 = vmatpush1.msra.mxu0 0.0
        %1882 = vmatprep.subr.mxu0 0.0
        %1883 = vmatpush1.msra.mxu0 0.0
        %1884 = vmatprep.subr.mxu0 0.0
        %1885 = vmatpush1.msra.mxu0 0.0
        %1886 = vmatprep.subr.mxu0 0.0
        %1887 = vmatpush1.msra.mxu0 0.0
        %1888 = vmatprep.subr.mxu0 0.0
        %1889 = vmatpush1.msra.mxu0 0.0
        %1890 = vmatprep.subr.mxu0 0.0
        %1891 = vmatpush1.msra.mxu0 0.0
        %1892 = vmatprep.subr.mxu0 0.0
        %1893 = vmatpush1.msra.mxu0 0.0
        %1894 = vmatprep.subr.mxu0 0.0
        %1895 = vmatpush1.msra.mxu0 0.0
        %1896 = vmatprep.subr.mxu0 0.0
        %1897 = vmatpush1.msra.mxu0 0.0
        %1898 = vmatprep.subr.mxu0 0.0
        %1899 = vmatpush1.msra.mxu0 0.0
        %1900 = vmatprep.subr.mxu0 0.0
        %1901 = vmatpush1.msra.mxu0 0.0
        %1902 = vmatprep.subr.mxu0 0.0
        %1903 = vmatpush1.msra.mxu0 0.0
        %1904 = vmatprep.subr.mxu0 0.0
        %1905 = vmatpush1.msra.mxu0 0.0
        %1906 = vmatprep.subr.mxu0 0.0
        %1907 = vmatpush1.msra.mxu0 0.0
        %1908 = vmatprep.subr.mxu0 0.0
        %1909 = vmatpush1.msra.mxu0 0.0
        %1910 = vmatprep.subr.mxu0 0.0
        %1911 = vmatpush1.msra.mxu0 0.0
        %1912 = vmatprep.subr.mxu0 0.0
        %1913 = vmatpush1.msra.mxu0 0.0
        %1914 = vmatprep.subr.mxu0 0.0
        %1915 = vmatpush1.msra.mxu0 0.0
        %1916 = vmatprep.subr.mxu0 0.0
        %1917 = vmatpush1.msra.mxu0 0.0
        %1918 = vmatprep.subr.mxu0 0.0
        %1919 = vmatpush1.msra.mxu0 0.0
        %1920 = vmatprep.subr.mxu0 0.0
        %1921 = vmatpush1.msra.mxu0 0.0
        %1922 = vmatprep.mubr.f32.mxu0 0.0
        %1923 = vmatmul.mubr.f32.gmra.mrb[0].mxu0 %v1042
        %v1924 = vpop.f32.mrb[0].mxu0
        %v1925 = vadd.f32 0.0, %v1924
        %v1926 = vpop.f32.mrb[0].mxu0
        %1927 = vmatprep.mubr.f32.mxu0 0.0
        %1928 = vmatmul.mubr.f32.gmra.mrb[0].mxu0 %v1045
        %v1929 = vpop.f32.mrb[0].mxu0
        %v1930 = vadd.f32 0.0, %v1929
        %v1931 = vpop.f32.mrb[0].mxu0
        %1932 = vdwg.mxu0
        %v1934 = vsel %vm878, %v1696, 0
        %1936 = vmatprep.subr.mxu0 0.0
        %1937 = vmatpush1.msra.mxu0 %v1691
        %1938 = vmatprep.subr.mxu0 0.0
        %1939 = vmatpush1.msra.mxu0 %v1934
        %1940 = vmatprep.subr.mxu0 0.0
        %1941 = vmatpush1.msra.mxu0 0.0
        %1942 = vmatprep.subr.mxu0 0.0
        %1943 = vmatpush1.msra.mxu0 0.0
        %1944 = vmatprep.subr.mxu0 0.0
        %1945 = vmatpush1.msra.mxu0 0.0
        %1946 = vmatprep.subr.mxu0 0.0
        %1947 = vmatpush1.msra.mxu0 0.0
        %1948 = vmatprep.subr.mxu0 0.0
        %1949 = vmatpush1.msra.mxu0 0.0
        %1950 = vmatprep.subr.mxu0 0.0
        %1951 = vmatpush1.msra.mxu0 0.0
        %1952 = vmatprep.subr.mxu0 0.0
        %1953 = vmatpush1.msra.mxu0 0.0
        %1954 = vmatprep.subr.mxu0 0.0
        %1955 = vmatpush1.msra.mxu0 0.0
        %1956 = vmatprep.subr.mxu0 0.0
        %1957 = vmatpush1.msra.mxu0 0.0
        %1958 = vmatprep.subr.mxu0 0.0
        %1959 = vmatpush1.msra.mxu0 0.0
        %1960 = vmatprep.subr.mxu0 0.0
        %1961 = vmatpush1.msra.mxu0 0.0
        %1962 = vmatprep.subr.mxu0 0.0
        %1963 = vmatpush1.msra.mxu0 0.0
        %1964 = vmatprep.subr.mxu0 0.0
        %1965 = vmatpush1.msra.mxu0 0.0
        %1966 = vmatprep.subr.mxu0 0.0
        %1967 = vmatpush1.msra.mxu0 0.0
        %1968 = vmatprep.subr.mxu0 0.0
        %1969 = vmatpush1.msra.mxu0 0.0
        %1970 = vmatprep.subr.mxu0 0.0
        %1971 = vmatpush1.msra.mxu0 0.0
        %1972 = vmatprep.subr.mxu0 0.0
        %1973 = vmatpush1.msra.mxu0 0.0
        %1974 = vmatprep.subr.mxu0 0.0
        %1975 = vmatpush1.msra.mxu0 0.0
        %1976 = vmatprep.subr.mxu0 0.0
        %1977 = vmatpush1.msra.mxu0 0.0
        %1978 = vmatprep.subr.mxu0 0.0
        %1979 = vmatpush1.msra.mxu0 0.0
        %1980 = vmatprep.subr.mxu0 0.0
        %1981 = vmatpush1.msra.mxu0 0.0
        %1982 = vmatprep.subr.mxu0 0.0
        %1983 = vmatpush1.msra.mxu0 0.0
        %1984 = vmatprep.subr.mxu0 0.0
        %1985 = vmatpush1.msra.mxu0 0.0
        %1986 = vmatprep.subr.mxu0 0.0
        %1987 = vmatpush1.msra.mxu0 0.0
        %1988 = vmatprep.subr.mxu0 0.0
        %1989 = vmatpush1.msra.mxu0 0.0
        %1990 = vmatprep.subr.mxu0 0.0
        %1991 = vmatpush1.msra.mxu0 0.0
        %1992 = vmatprep.subr.mxu0 0.0
        %1993 = vmatpush1.msra.mxu0 0.0
        %1994 = vmatprep.subr.mxu0 0.0
        %1995 = vmatpush1.msra.mxu0 0.0
        %1996 = vmatprep.subr.mxu0 0.0
        %1997 = vmatpush1.msra.mxu0 0.0
        %1998 = vmatprep.subr.mxu0 0.0
        %1999 = vmatpush1.msra.mxu0 0.0
        %2000 = vmatprep.mubr.f32.mxu0 0.0
        %2001 = vmatmul.mubr.f32.gmra.mrb[0].mxu0 %v1126
        %v2002 = vpop.f32.mrb[0].mxu0
        %v2003 = vadd.f32 0.0, %v2002
        %v2004 = vpop.f32.mrb[0].mxu0
        %2005 = vmatprep.mubr.f32.mxu0 0.0
        %2006 = vmatmul.mubr.f32.gmra.mrb[0].mxu0 %v1129
        %v2007 = vpop.f32.mrb[0].mxu0
        %v2008 = vadd.f32 0.0, %v2007
        %v2009 = vpop.f32.mrb[0].mxu0
        %2010 = vdwg.mxu0
        %v2011 = vmul.f32 %v1769, %v1212
        %v2012 = vmul.f32 %v1774, %v1217
        %v2013 = vmul.f32 %v1847, %v1222
        %v2014 = vmul.f32 %v1852, %v1227
        %v2015 = vmul.f32 %v1925, %v1232
        %v2016 = vmul.f32 %v1930, %v1237
        %v2017 = vmul.f32 %v2003, %v1242
        %v2018 = vmul.f32 %v2008, %v1247
        %v2019 = vadd.f32 %v1361, %v2011
        %v2020 = vadd.f32 %v1366, %v2012
        %v2021 = vadd.f32 %v1371, %v2013
        %v2022 = vadd.f32 %v1376, %v2014
        %v2023 = vadd.f32 %v1381, %v2015
        %v2024 = vadd.f32 %v1386, %v2016
        %v2025 = vadd.f32 %v1391, %v2017
        %v2026 = vadd.f32 %v1396, %v2018
        %v2027 = vlaneseq
        %v2028 = vshrl.u32 %v2027, 7
        %v2029 = vsub.s32 0, %v2028
        %v2030 = vrot.slane %v281, %v2029
        %v2031 = vmul.f32 %v2019, %v2030
        %v2032 = vmul.f32 %v2020, %v2030
        %v2033 = vmul.f32 %v2021, %v2030
        %v2034 = vmul.f32 %v2022, %v2030
        %v2035 = vmul.f32 %v2023, %v2030
        %v2036 = vmul.f32 %v2024, %v2030
        %v2037 = vmul.f32 %v2025, %v2030
        %v2038 = vmul.f32 %v2026, %v2030
        %v2039 = vsel %vm1269, %v2031, 0.0
        %2040 = vadd.xlane.f32.xlu0 %v2039
        %v2041 = vpop.xlane.xlu0 %2040
        %v2042 = vsel %vm1269, %v2032, 0.0
        %2043 = vadd.xlane.f32.xlu0 %v2042
        %v2044 = vpop.xlane.xlu0 %2043
        %v2045 = vsel %vm1269, %v2033, 0.0
        %2046 = vadd.xlane.f32.xlu0 %v2045
        %v2047 = vpop.xlane.xlu0 %2046
        %v2048 = vsel %vm1269, %v2034, 0.0
        %2049 = vadd.xlane.f32.xlu0 %v2048
        %v2050 = vpop.xlane.xlu0 %2049
        %v2051 = vsel %vm1269, %v2035, 0.0
        %2052 = vadd.xlane.f32.xlu0 %v2051
        %v2053 = vpop.xlane.xlu0 %2052
        %v2054 = vsel %vm1269, %v2036, 0.0
        %2055 = vadd.xlane.f32.xlu0 %v2054
        %v2056 = vpop.xlane.xlu0 %2055
        %v2057 = vsel %vm1269, %v2037, 0.0
        %2058 = vadd.xlane.f32.xlu0 %v2057
        %v2059 = vpop.xlane.xlu0 %2058
        %v2060 = vsel %vm1269, %v2038, 0.0
        %2061 = vadd.xlane.f32.xlu0 %v2060
        %v2062 = vpop.xlane.xlu0 %2061
        %s2064 = vtos %v283
        %v2065 = vstv %s2064
        %v2067 = vadd.f32 %v2041, %v2065
        %v2068 = vadd.f32 %v2044, %v2065
        %v2069 = vadd.f32 %v2047, %v2065
        %v2070 = vadd.f32 %v2050, %v2065
        %v2071 = vadd.f32 %v2053, %v2065
        %v2072 = vadd.f32 %v2056, %v2065
        %v2073 = vadd.f32 %v2059, %v2065
        %v2074 = vadd.f32 %v2062, %v2065
        %v2075 = vlaneseq
        %v2076 = vshrl.u32 %v2075, 7
        %v2077 = vsub.s32 0, %v2076
        %v2078 = vrot.slane %v282, %v2077
        %v2079 = vmul.f32 %v1466, %v2078
        %v2080 = vmul.f32 %v1471, %v2078
        %v2081 = vmul.f32 %v1541, %v2078
        %v2082 = vmul.f32 %v1546, %v2078
        %v2083 = vmul.f32 %v1616, %v2078
        %v2084 = vmul.f32 %v1621, %v2078
        %v2085 = vmul.f32 %v1691, %v2078
        %v2086 = vmul.f32 %v1696, %v2078
        %v2087 = vsel %vm1269, %v2079, 0.0
        %2088 = vadd.xlane.f32.xlu0 %v2087
        %v2089 = vpop.xlane.xlu0 %2088
        %vm2090 = vcmask 257024
        %v2091 = vsel %vm2090, %v2080, 0.0
        %2092 = vadd.xlane.f32.xlu0 %v2091
        %v2093 = vpop.xlane.xlu0 %2092
        %v2094 = vsel %vm1269, %v2081, 0.0
        %2095 = vadd.xlane.f32.xlu0 %v2094
        %v2096 = vpop.xlane.xlu0 %2095
        %v2097 = vsel %vm2090, %v2082, 0.0
        %2098 = vadd.xlane.f32.xlu0 %v2097
        %v2099 = vpop.xlane.xlu0 %2098
        %v2100 = vsel %vm1269, %v2083, 0.0
        %2101 = vadd.xlane.f32.xlu0 %v2100
        %v2102 = vpop.xlane.xlu0 %2101
        %v2103 = vsel %vm2090, %v2084, 0.0
        %2104 = vadd.xlane.f32.xlu0 %v2103
        %v2105 = vpop.xlane.xlu0 %2104
        %v2106 = vsel %vm1269, %v2085, 0.0
        %2107 = vadd.xlane.f32.xlu0 %v2106
        %v2108 = vpop.xlane.xlu0 %2107
        %v2109 = vsel %vm2090, %v2086, 0.0
        %2110 = vadd.xlane.f32.xlu0 %v2109
        %v2111 = vpop.xlane.xlu0 %2110
        %2112 = vrot.lane.b32.xlu0 %v283, 127
        %v2113 = vpop.permute.xlu0 %2112
        %s2114 = vtos %v2113
        %v2115 = vstv %s2114
        %v2117 = vadd.f32 %v2089, %v2115
        %v2118 = vadd.f32 %v2093, %v2115
        %v2119 = vadd.f32 %v2096, %v2115
        %v2120 = vadd.f32 %v2099, %v2115
        %v2121 = vadd.f32 %v2102, %v2115
        %v2122 = vadd.f32 %v2105, %v2115
        %v2123 = vadd.f32 %v2108, %v2115
        %v2124 = vadd.f32 %v2111, %v2115
        %vm2125 = vcmp.ne.f32.partialorder %v2067, %v2067
        %vm2126 = vcmp.ne.f32.partialorder %v2068, %v2068
        %vm2127 = vcmp.ne.f32.partialorder %v2069, %v2069
        %vm2128 = vcmp.ne.f32.partialorder %v2070, %v2070
        %vm2129 = vcmp.ne.f32.partialorder %v2071, %v2071
        %vm2130 = vcmp.ne.f32.partialorder %v2072, %v2072
        %vm2131 = vcmp.ne.f32.partialorder %v2073, %v2073
        %vm2132 = vcmp.ne.f32.partialorder %v2074, %v2074
        %v2133 = vsel %vm2125, 0.0, 1.0
        %v2134 = vsel %vm2126, 0.0, 1.0
        %v2135 = vsel %vm2127, 0.0, 1.0
        %v2136 = vsel %vm2128, 0.0, 1.0
        %v2137 = vsel %vm2129, 0.0, 1.0
        %v2138 = vsel %vm2130, 0.0, 1.0
        %v2139 = vsel %vm2131, 0.0, 1.0
        %v2140 = vsel %vm2132, 0.0, 1.0
        %v2149 = vlaneseq
        %v2150 = vand.u32 %v2149, 127
        %v2151 = vlaneseq
        %v2152 = vshrl.u32 %v2151, 7
        %v2153 = vsub.s32 %v2150, %v2152
        %v2154 = vrot.slane %v2133, %v2153
        %v2155 = vadd.s32 %v2150, 4294967288
        %v2156 = vlaneseq
        %v2157 = vshrl.u32 %v2156, 7
        %v2158 = vsub.s32 %v2155, %v2157
        %v2159 = vrot.slane %v2134, %v2158
        %vm2160 = vcmask 130112
        %v2161 = vsel %vm2160, %v2159, %v2154
        %v2162 = vlaneseq
        %v2163 = vshrl.u32 %v2162, 7
        %v2164 = vsub.s32 %v2150, %v2163
        %v2165 = vrot.slane %v2135, %v2164
        %v2166 = vlaneseq
        %v2167 = vshrl.u32 %v2166, 7
        %v2168 = vsub.s32 %v2155, %v2167
        %v2169 = vrot.slane %v2136, %v2168
        %v2170 = vsel %vm2160, %v2169, %v2165
        %v2171 = vlaneseq
        %v2172 = vshrl.u32 %v2171, 7
        %v2173 = vsub.s32 %v2150, %v2172
        %v2174 = vrot.slane %v2137, %v2173
        %v2175 = vlaneseq
        %v2176 = vshrl.u32 %v2175, 7
        %v2177 = vsub.s32 %v2155, %v2176
        %v2178 = vrot.slane %v2138, %v2177
        %v2179 = vsel %vm2160, %v2178, %v2174
        %v2180 = vlaneseq
        %v2181 = vshrl.u32 %v2180, 7
        %v2182 = vsub.s32 %v2150, %v2181
        %v2183 = vrot.slane %v2139, %v2182
        %v2184 = vlaneseq
        %v2185 = vshrl.u32 %v2184, 7
        %v2186 = vsub.s32 %v2155, %v2185
        %v2187 = vrot.slane %v2140, %v2186
        %v2188 = vsel %vm2160, %v2187, %v2183
        %vm2189 = vcmask 1041409
        %v2190 = vsel %vm2189, %v2170, %v2161
        %vm2191 = vcmask 1042434
        %v2192 = vsel %vm2191, %v2179, %v2190
        %vm2193 = vcmask 1043459
        %v2194 = vsel %vm2193, %v2188, %v2192
        %vm2196 = vcmask 125952
        %v2197 = vsel %vm2196, %v2194, 0.0
        %2198 = vadd.xlane.f32.xlu0 %v2197
        %v2199 = vpop.xlane.xlu0 %2198
        %v2200 = vsel %vm2125, 0.0, %v2067
        %v2201 = vsel %vm2126, 0.0, %v2068
        %v2202 = vsel %vm2127, 0.0, %v2069
        %v2203 = vsel %vm2128, 0.0, %v2070
        %v2204 = vsel %vm2129, 0.0, %v2071
        %v2205 = vsel %vm2130, 0.0, %v2072
        %v2206 = vsel %vm2131, 0.0, %v2073
        %v2207 = vsel %vm2132, 0.0, %v2074
        %v2216 = vlaneseq
        %v2217 = vshrl.u32 %v2216, 7
        %v2218 = vsub.s32 %v2150, %v2217
        %v2219 = vrot.slane %v2200, %v2218
        %v2220 = vlaneseq
        %v2221 = vshrl.u32 %v2220, 7
        %v2222 = vsub.s32 %v2155, %v2221
        %v2223 = vrot.slane %v2201, %v2222
        %v2224 = vsel %vm2160, %v2223, %v2219
        %v2225 = vlaneseq
        %v2226 = vshrl.u32 %v2225, 7
        %v2227 = vsub.s32 %v2150, %v2226
        %v2228 = vrot.slane %v2202, %v2227
        %v2229 = vlaneseq
        %v2230 = vshrl.u32 %v2229, 7
        %v2231 = vsub.s32 %v2155, %v2230
        %v2232 = vrot.slane %v2203, %v2231
        %v2233 = vsel %vm2160, %v2232, %v2228
        %v2234 = vlaneseq
        %v2235 = vshrl.u32 %v2234, 7
        %v2236 = vsub.s32 %v2150, %v2235
        %v2237 = vrot.slane %v2204, %v2236
        %v2238 = vlaneseq
        %v2239 = vshrl.u32 %v2238, 7
        %v2240 = vsub.s32 %v2155, %v2239
        %v2241 = vrot.slane %v2205, %v2240
        %v2242 = vsel %vm2160, %v2241, %v2237
        %v2243 = vlaneseq
        %v2244 = vshrl.u32 %v2243, 7
        %v2245 = vsub.s32 %v2150, %v2244
        %v2246 = vrot.slane %v2206, %v2245
        %v2247 = vlaneseq
        %v2248 = vshrl.u32 %v2247, 7
        %v2249 = vsub.s32 %v2155, %v2248
        %v2250 = vrot.slane %v2207, %v2249
        %v2251 = vsel %vm2160, %v2250, %v2246
        %v2252 = vsel %vm2189, %v2233, %v2224
        %v2253 = vsel %vm2191, %v2242, %v2252
        %v2254 = vsel %vm2193, %v2251, %v2253
        %v2256 = vsel %vm2196, %v2254, 0.0
        %2257 = vadd.xlane.f32.xlu0 %v2256
        %v2258 = vpop.xlane.xlu0 %2257
        %v2259 = vrcp.pop %v2199
        %v2260 = vmul.f32 %v2258, %v2259
        %vm2261 = vcmp.ne.f32.partialorder %v2260, %v2260
        %v2262 = vsel %vm2261, 0.0, %v2260
        %vm2263 = vcmp.ne.f32.partialorder %v2117, %v2117
        %vm2264 = vcmp.ne.f32.partialorder %v2118, %v2118
        %vm2265 = vcmp.ne.f32.partialorder %v2119, %v2119
        %vm2266 = vcmp.ne.f32.partialorder %v2120, %v2120
        %vm2267 = vcmp.ne.f32.partialorder %v2121, %v2121
        %vm2268 = vcmp.ne.f32.partialorder %v2122, %v2122
        %vm2269 = vcmp.ne.f32.partialorder %v2123, %v2123
        %vm2270 = vcmp.ne.f32.partialorder %v2124, %v2124
        %v2271 = vsel %vm2263, 0.0, 1.0
        %v2272 = vsel %vm2264, 0.0, 1.0
        %v2273 = vsel %vm2265, 0.0, 1.0
        %v2274 = vsel %vm2266, 0.0, 1.0
        %v2275 = vsel %vm2267, 0.0, 1.0
        %v2276 = vsel %vm2268, 0.0, 1.0
        %v2277 = vsel %vm2269, 0.0, 1.0
        %v2278 = vsel %vm2270, 0.0, 1.0
        %v2287 = vlaneseq
        %v2288 = vshrl.u32 %v2287, 7
        %v2289 = vsub.s32 %v2150, %v2288
        %v2290 = vrot.slane %v2271, %v2289
        %v2291 = vlaneseq
        %v2292 = vshrl.u32 %v2291, 7
        %v2293 = vsub.s32 %v2155, %v2292
        %v2294 = vrot.slane %v2272, %v2293
        %v2295 = vsel %vm2160, %v2294, %v2290
        %v2296 = vlaneseq
        %v2297 = vshrl.u32 %v2296, 7
        %v2298 = vsub.s32 %v2150, %v2297
        %v2299 = vrot.slane %v2273, %v2298
        %v2300 = vlaneseq
        %v2301 = vshrl.u32 %v2300, 7
        %v2302 = vsub.s32 %v2155, %v2301
        %v2303 = vrot.slane %v2274, %v2302
        %v2304 = vsel %vm2160, %v2303, %v2299
        %v2305 = vlaneseq
        %v2306 = vshrl.u32 %v2305, 7
        %v2307 = vsub.s32 %v2150, %v2306
        %v2308 = vrot.slane %v2275, %v2307
        %v2309 = vlaneseq
        %v2310 = vshrl.u32 %v2309, 7
        %v2311 = vsub.s32 %v2155, %v2310
        %v2312 = vrot.slane %v2276, %v2311
        %v2313 = vsel %vm2160, %v2312, %v2308
        %v2314 = vlaneseq
        %v2315 = vshrl.u32 %v2314, 7
        %v2316 = vsub.s32 %v2150, %v2315
        %v2317 = vrot.slane %v2277, %v2316
        %v2318 = vlaneseq
        %v2319 = vshrl.u32 %v2318, 7
        %v2320 = vsub.s32 %v2155, %v2319
        %v2321 = vrot.slane %v2278, %v2320
        %v2322 = vsel %vm2160, %v2321, %v2317
        %v2323 = vsel %vm2189, %v2304, %v2295
        %v2324 = vsel %vm2191, %v2313, %v2323
        %v2325 = vsel %vm2193, %v2322, %v2324
        %vm2327 = vcmask 93184
        %v2328 = vsel %vm2327, %v2325, 0.0
        %2329 = vadd.xlane.f32.xlu0 %v2328
        %v2330 = vpop.xlane.xlu0 %2329
        %v2331 = vsel %vm2263, 0.0, %v2117
        %v2332 = vsel %vm2264, 0.0, %v2118
        %v2333 = vsel %vm2265, 0.0, %v2119
        %v2334 = vsel %vm2266, 0.0, %v2120
        %v2335 = vsel %vm2267, 0.0, %v2121
        %v2336 = vsel %vm2268, 0.0, %v2122
        %v2337 = vsel %vm2269, 0.0, %v2123
        %v2338 = vsel %vm2270, 0.0, %v2124
        %v2347 = vlaneseq
        %v2348 = vshrl.u32 %v2347, 7
        %v2349 = vsub.s32 %v2150, %v2348
        %v2350 = vrot.slane %v2331, %v2349
        %v2351 = vlaneseq
        %v2352 = vshrl.u32 %v2351, 7
        %v2353 = vsub.s32 %v2155, %v2352
        %v2354 = vrot.slane %v2332, %v2353
        %v2355 = vsel %vm2160, %v2354, %v2350
        %v2356 = vlaneseq
        %v2357 = vshrl.u32 %v2356, 7
        %v2358 = vsub.s32 %v2150, %v2357
        %v2359 = vrot.slane %v2333, %v2358
        %v2360 = vlaneseq
        %v2361 = vshrl.u32 %v2360, 7
        %v2362 = vsub.s32 %v2155, %v2361
        %v2363 = vrot.slane %v2334, %v2362
        %v2364 = vsel %vm2160, %v2363, %v2359
        %v2365 = vlaneseq
        %v2366 = vshrl.u32 %v2365, 7
        %v2367 = vsub.s32 %v2150, %v2366
        %v2368 = vrot.slane %v2335, %v2367
        %v2369 = vlaneseq
        %v2370 = vshrl.u32 %v2369, 7
        %v2371 = vsub.s32 %v2155, %v2370
        %v2372 = vrot.slane %v2336, %v2371
        %v2373 = vsel %vm2160, %v2372, %v2368
        %v2374 = vlaneseq
        %v2375 = vshrl.u32 %v2374, 7
        %v2376 = vsub.s32 %v2150, %v2375
        %v2377 = vrot.slane %v2337, %v2376
        %v2378 = vlaneseq
        %v2379 = vshrl.u32 %v2378, 7
        %v2380 = vsub.s32 %v2155, %v2379
        %v2381 = vrot.slane %v2338, %v2380
        %v2382 = vsel %vm2160, %v2381, %v2377
        %v2383 = vsel %vm2189, %v2364, %v2355
        %v2384 = vsel %vm2191, %v2373, %v2383
        %v2385 = vsel %vm2193, %v2382, %v2384
        %v2387 = vsel %vm2327, %v2385, 0.0
        %2388 = vadd.xlane.f32.xlu0 %v2387
        %v2389 = vpop.xlane.xlu0 %2388
        %v2390 = vrcp.pop %v2330
        %v2391 = vmul.f32 %v2389, %v2390
        %vm2392 = vcmp.ne.f32.partialorder %v2391, %v2391
        %v2393 = vsel %vm2392, 0.0, %v2391
        %v2394 = vadd.f32 %v2262, %v2393
        %v2396 = vlaneseq
        %v2397 = vshrl.u32 %v2396, 7
        %v2398 = vsub.s32 %v2150, %v2397
        %v2399 = vrot.slane %v2394, %v2398
        %vm2401 = vcmask 24576
        %2402 = vst.msk [vmem:[%s228] sm:$0x1] %vm2401, %v2399
        %s2403 = sand.u32 %s125, 1
        %s2404 = scalar_lea.sflag [#allocation3], %s2403
        %s2405 = sand.u32 %s125, 1
        %s2406 = scalar_lea.vmem [#allocation2], %s2405
        // Predicated region
        $region37: #{tpu_custom_call.1} parent=35 // pred_check
          %p2407 = pneg %p135
        $region38: #{tpu_custom_call.1} parent=35 // pred_check_branch
          %2409 = sbr.rel (%p2407) target = $region40
        $region39: #{tpu_custom_call.1} parent=35 // pred_region
          %s2411 = ssub.s32 16, 16
          %2412 = vsyncadd %s2404, %s2411
          %s2413 = smul.addr %s18, 16
          %s2414 = scalar_lea.hbm %s4, %s2413
          %s2416 = sshll.u32 %s2406, 4
          %s2417 = int_to_ptr.vmem [resolvable:$true] %s2416
          %2419 = dma.vmem_to_hbm [thread:$0]  %s2417, 16, %s2414, %s2404
        $region40: #{tpu_custom_call.1} parent=35 // pred_fallthru
          _
      $region36: #{tpu_custom_call.1} parent=5 // pred_fallthru
        _
      %p2420 = scmp.le.s32.totalorder 2, %s13
      // Predicated region
      $region41: #{tpu_custom_call.1} parent=5 // pred_check
        %p2421 = pneg %p2420
      $region42: #{tpu_custom_call.1} parent=5 // pred_check_branch
        %2423 = sbr.rel (%p2421) target = $region44
      $region43: #{tpu_custom_call.1} parent=5 // pred_region
        %s2424 = ssub.s32 %s13, 2
        // Predicated region
        $region45: #{tpu_custom_call.1} parent=43 // pred_check
          %p2425 = pneg %p141
        $region46: #{tpu_custom_call.1} parent=43 // pred_check_branch
          %2427 = sbr.rel (%p2425) target = $region48
        $region47: #{tpu_custom_call.1} parent=43 // pred_region
          %s2428 = sand.u32 %s126, 1
          %s2429 = scalar_lea.sflag [#allocation3], %s2428
          %s2430 = sand.u32 %s126, 1
          %s2431 = scalar_lea.vmem [#allocation2], %s2430
          %2432 = dma.done %s2429, 16
        $region48: #{tpu_custom_call.1} parent=43 // pred_fallthru
          _
      $region44: #{tpu_custom_call.1} parent=5 // pred_fallthru
        _
    $region6: #{tpu_custom_call.1} parent=1 // loop_footer
      %s17 = sadd.s32 1, %s13
    $region7: #{tpu_custom_call.1} parent=1 // loop_footer_branch
      %12 = sbr.rel target = $region3
    $region8: #{tpu_custom_call.1} parent=1 // loop_exit
      _
    %2433 = vsyncpa [#allocation3], 1
    %s2434 = scalar_lea.sflag [#allocation3], 1
    %2435 = vsyncpa %s2434, 1

</llo_original>
